<compile_context>
chip_gen: v7x
topology: tpu7x:2x2x1
jax: 0.10.0
libtpu: 0.0.40
codegen_flags: <defaults>
</compile_context>

<pallas_src>
import functools

import jax
import jax.numpy as jnp
from jax.experimental import pallas as pl
from jax.experimental.pallas import tpu as pltpu


# --------------------------------- kernel -----------------------------------

def _attention_kernel(heads, dim_head, x_ref, wqkv_ref, wo_ref, bo_ref, o_ref):
    # x_ref    : (N, D)         one batch element's tokens (bf16)
    # wqkv_ref : (D, 3*inner)   fused [q | k | v] projection weights (bf16, q pre-scaled)
    # wo_ref   : (inner, D)     output projection weight (bf16)
    # bo_ref   : (1, D)         output projection bias (f32)
    n = x_ref.shape[0]
    inner = heads * dim_head

    x = x_ref[...]                                            # (N, D) bf16

    # Fused QKV projection: a single full-width MXU matmul, f32 accumulate.
    qkv = jnp.dot(x, wqkv_ref[...],
                  preferred_element_type=jnp.float32)         # (N, 3*inner) f32

    # Head split: move heads to a leading axis (free slicing afterwards).
    def to_heads(t):                                          # (N, inner) -> (h, N, dh)
        return t.reshape(n, heads, dim_head).transpose(1, 0, 2)

    q = to_heads(qkv[:, :inner])                              # scale folded into W_q
    k = to_heads(qkv[:, inner:2 * inner])
    v = to_heads(qkv[:, 2 * inner:])

    # Scores: contract the last axis of q and k (no materialized k transpose).
    s = jnp.einsum('hqd,hkd->hqk', q, k,
                   preferred_element_type=jnp.float32)        # (h, N, N)

    # Numerically-stable softmax in f32; divide replaced by EUP approx recip.
    s = s - jnp.max(s, axis=-1, keepdims=True)
    e = jnp.exp(s)
    attn = e * pl.reciprocal(jnp.sum(e, axis=-1, keepdims=True), approx=True)

    o = jnp.einsum('hqk,hkd->hqd', attn, v,
                   preferred_element_type=jnp.float32)        # (h, N, dh)

    # Collapse heads back onto lanes -> one (N, inner) x (inner, D) matmul.
    o2 = o.transpose(1, 0, 2).reshape(n, inner).astype(wo_ref.dtype)
    out = jnp.dot(o2, wo_ref[...], preferred_element_type=jnp.float32)
    o_ref[...] = (out + bo_ref[0]).astype(o_ref.dtype)        # lane-dense store


# -------------------------------- wrapper ------------------------------------

def attention_forward(x, params, *, heads, dim_head):
    """x: (B, N, D) float32.  params: w_qkv (D, 3*inner), w_out (inner, D), b_out (1, D)."""
    B, N, D = x.shape
    inner = heads * dim_head
    scale = dim_head ** (-0.5)

    w_qkv, w_out, b_out = params["w_qkv"], params["w_out"], params["b_out"]

    # Layout / precision hoist (plain-JAX glue): fold the attention scale into
    # the Q columns of the fused QKV weight, cast MXU inputs to bf16.
    w_qkv = jnp.concatenate([w_qkv[:, :inner] * scale, w_qkv[:, inner:]],
                            axis=-1).astype(jnp.bfloat16)     # (D, 3*inner)
    w_out = w_out.astype(jnp.bfloat16)                        # (inner, D)
    b_out = b_out.astype(jnp.float32)                         # (1, D)
    x_bf = x.astype(jnp.bfloat16)

    kernel = functools.partial(_attention_kernel, heads, dim_head)

    flops = B * (2 * N * D * 3 * inner                         # fused QKV projection
                 + 2 * 2 * heads * N * N * dim_head            # scores + attn@v
                 + 2 * N * inner * D)                          # output projection
    transcendentals = B * heads * N * N                        # exp in softmax
    bytes_accessed = (x_bf.size * 2 + w_qkv.size * 2 + w_out.size * 2
                      + b_out.size * 4 + B * N * D * 4)

    return pl.pallas_call(
        kernel,
        out_shape=jax.ShapeDtypeStruct((B, N, D), jnp.float32),
        grid=(B,),
        in_specs=[
            pl.BlockSpec((None, N, D), lambda b: (b, 0, 0)),   # x: one batch element
            pl.BlockSpec((D, 3 * inner), lambda b: (0, 0)),    # fused W_qkv (constant)
            pl.BlockSpec((inner, D), lambda b: (0, 0)),        # W_out (constant)
            pl.BlockSpec((1, D), lambda b: (0, 0)),            # b_out (constant)
        ],
        out_specs=pl.BlockSpec((None, N, D), lambda b: (b, 0, 0)),
        compiler_params=pltpu.CompilerParams(
            dimension_semantics=("parallel",)),
        cost_estimate=pl.CostEstimate(flops=flops,
                                      transcendentals=transcendentals,
                                      bytes_accessed=bytes_accessed),
    )(x_bf, w_qkv, w_out, b_out)


# ------------------------- pure-JAX reference (check) -------------------------

def attention_ref(x, params, *, heads, dim_head):
    B, N, D = x.shape
    inner = heads * dim_head
    scale = dim_head ** (-0.5)
    qkv = x @ params["w_qkv"]                                  # (B, N, 3*inner)
    q, k, v = jnp.split(qkv, 3, axis=-1)

    def to_heads(t):                                           # 'b n (h d) -> b h n d'
        return t.reshape(B, N, heads, dim_head).transpose(0, 2, 1, 3)

    q, k, v = map(to_heads, (q, k, v))
    dots = jnp.einsum('bhqd,bhkd->bhqk', q, k) * scale
    attn = jax.nn.softmax(dots, axis=-1)                       # dropout(p=0) = identity
    out = jnp.einsum('bhqk,bhkd->bhqd', attn, v)
    out = out.transpose(0, 2, 1, 3).reshape(B, N, inner)       # 'b h n d -> b n (h d)'
    return out @ params["w_out"] + params["b_out"][0]


# ----------------------------------- main -------------------------------------

if __name__ == "__main__":
    B, N, D = 2, 16, 128            # batch, tokens, model dim (lane-dense)
    heads, dim_head = 4, 32
    inner = heads * dim_head

    key = jax.random.PRNGKey(0)
    kx, kqkv, ko = jax.random.split(key, 3)

    x = jax.random.normal(kx, (B, N, D), jnp.float32)
    params = dict(
        w_qkv=jax.random.normal(kqkv, (D, 3 * inner), jnp.float32) * (D ** -0.5),
        w_out=jax.random.normal(ko, (inner, D), jnp.float32) * (inner ** -0.5),
        b_out=jnp.zeros((1, D), jnp.float32),
    )

    out = attention_forward(x, params, heads=heads, dim_head=dim_head)
    jax.block_until_ready(out)
    assert out.shape == (B, N, D)

    # Compare against a reference run on the same bf16-rounded inputs/weights
    # the kernel consumes, so the check isolates kernel logic from the (intended)
    # bf16 input quantization.
    def bf16_round(t):
        return t.astype(jnp.bfloat16).astype(jnp.float32)

    params_q = dict(w_qkv=bf16_round(params["w_qkv"]),
                    w_out=bf16_round(params["w_out"]),
                    b_out=params["b_out"])
    ref = attention_ref(bf16_round(x), params_q, heads=heads, dim_head=dim_head)

    err = float(jnp.max(jnp.abs(out - ref)))
    # tolerance: bf16 scale-fold rounding, bf16 input to the output-projection
    # matmul, and the EUP approx reciprocal in the softmax denominator.
    assert err < 5e-2, f"max abs error vs reference: {err}"

    print("KERNEL_OK")
</pallas_src>

<mosaic_0001>
module attributes {stable_mosaic.version = 11 : i64} {
  func.func @_attention_kernel(%arg0: i32, %arg1: memref<1x16x128xbf16, #tpu.memory_space<vmem>>, %arg2: memref<128x384xbf16, #tpu.memory_space<vmem>>, %arg3: memref<128x128xbf16, #tpu.memory_space<vmem>>, %arg4: memref<1x128xf32, #tpu.memory_space<vmem>>, %arg5: memref<1x16x128xf32, #tpu.memory_space<vmem>>) attributes {dimension_semantics = [#tpu.dimension_semantics<parallel>], iteration_bounds = array<i64: 2>, scalar_prefetch = 0 : i64, scratch_operands = 0 : i64, tpu.core_type = #tpu.core_type<tc>, window_params = [{transform_indices = @transform_0, window_bounds = array<i64: 1, 16, 128>}, {pipeline_mode = #tpu.pipeline_mode<synchronous>, transform_indices = @transform_1, window_bounds = array<i64: 128, 384>}, {pipeline_mode = #tpu.pipeline_mode<synchronous>, transform_indices = @transform_2, window_bounds = array<i64: 128, 128>}, {pipeline_mode = #tpu.pipeline_mode<synchronous>, transform_indices = @transform_3, window_bounds = array<i64: 1, 128>}, {transform_indices = @transform_4, window_bounds = array<i64: 1, 16, 128>}]} {
    %c0 = arith.constant 0 : index
    %c0_0 = arith.constant 0 : index
    %c0_1 = arith.constant 0 : index
    %0 = vector.load %arg1[%c0, %c0_0, %c0_1] : memref<1x16x128xbf16, #tpu.memory_space<vmem>>, vector<1x16x128xbf16>
    %1 = vector.shape_cast %0 : vector<1x16x128xbf16> to vector<16x128xbf16>
    %c0_2 = arith.constant 0 : index
    %c0_3 = arith.constant 0 : index
    %2 = vector.load %arg2[%c0_2, %c0_3] : memref<128x384xbf16, #tpu.memory_space<vmem>>, vector<128x384xbf16>
    %cst = arith.constant dense<0.000000e+00> : vector<16x384xf32>
    %3 = tpu.matmul %1, %2, %cst {dimension_numbers = #tpu.dot_dimension_numbers<[1], [0], [0], [1], [0, 0, 1, 1], [], []>} : vector<16x128xbf16>, vector<128x384xbf16>, vector<16x384xf32> -> vector<16x384xf32>
    %4 = vector.extract_strided_slice %3 {offsets = [0, 0], sizes = [16, 128], strides = [1, 1]} : vector<16x384xf32> to vector<16x128xf32>
    %5 = vector.shape_cast %4 : vector<16x128xf32> to vector<16x4x32xf32>
    %6 = tpu.transpose %5, [1, 0, 2] : vector<16x4x32xf32> -> vector<4x16x32xf32>
    %7 = vector.extract_strided_slice %3 {offsets = [0, 128], sizes = [16, 128], strides = [1, 1]} : vector<16x384xf32> to vector<16x128xf32>
    %8 = vector.shape_cast %7 : vector<16x128xf32> to vector<16x4x32xf32>
    %9 = tpu.transpose %8, [1, 0, 2] : vector<16x4x32xf32> -> vector<4x16x32xf32>
    %10 = vector.extract_strided_slice %3 {offsets = [0, 256], sizes = [16, 128], strides = [1, 1]} : vector<16x384xf32> to vector<16x128xf32>
    %11 = vector.shape_cast %10 : vector<16x128xf32> to vector<16x4x32xf32>
    %12 = tpu.transpose %11, [1, 0, 2] : vector<16x4x32xf32> -> vector<4x16x32xf32>
    "tpu.trace_start"() <{level = 10 : i32, message = "hqd,hkd->hqk"}> : () -> ()
    %cst_4 = arith.constant dense<0.000000e+00> : vector<4x16x16xf32>
    %13 = tpu.matmul %6, %9, %cst_4 {dimension_numbers = #tpu.dot_dimension_numbers<[2], [2], [1], [1], [0, 0, 0, 1, 1, 1], [0], [0]>} : vector<4x16x32xf32>, vector<4x16x32xf32>, vector<4x16x16xf32> -> vector<4x16x16xf32>
    "tpu.trace_stop"() : () -> ()
    %cst_5 = arith.constant dense<0xFF800000> : vector<4x16xf32>
    %14 = vector.multi_reduction <maximumf>, %13, %cst_5 [2] : vector<4x16x16xf32> to vector<4x16xf32>
    %15 = vector.shape_cast %14 : vector<4x16xf32> to vector<4x16x1xf32>
    %16 = vector.broadcast %15 : vector<4x16x1xf32> to vector<4x16x16xf32>
    %17 = arith.subf %13, %16 : vector<4x16x16xf32>
    %18 = math.exp %17 : vector<4x16x16xf32>
    %cst_6 = arith.constant dense<0.000000e+00> : vector<4x16xf32>
    %19 = vector.multi_reduction <add>, %18, %cst_6 [2] : vector<4x16x16xf32> to vector<4x16xf32>
    %20 = vector.shape_cast %19 : vector<4x16xf32> to vector<4x16x1xf32>
    %21 = tpu.reciprocal %20 {approx = true} : vector<4x16x1xf32> -> vector<4x16x1xf32>
    %22 = vector.broadcast %21 : vector<4x16x1xf32> to vector<4x16x16xf32>
    %23 = arith.mulf %18, %22 : vector<4x16x16xf32>
    "tpu.trace_start"() <{level = 10 : i32, message = "hqk,hkd->hqd"}> : () -> ()
    %cst_7 = arith.constant dense<0.000000e+00> : vector<4x16x32xf32>
    %24 = tpu.matmul %23, %12, %cst_7 {dimension_numbers = #tpu.dot_dimension_numbers<[2], [1], [1], [2], [0, 0, 0, 1, 1, 2], [0], [0]>} : vector<4x16x16xf32>, vector<4x16x32xf32>, vector<4x16x32xf32> -> vector<4x16x32xf32>
    "tpu.trace_stop"() : () -> ()
    %25 = tpu.transpose %24, [1, 0, 2] : vector<4x16x32xf32> -> vector<16x4x32xf32>
    %26 = vector.shape_cast %25 : vector<16x4x32xf32> to vector<16x128xf32>
    %27 = arith.truncf %26 : vector<16x128xf32> to vector<16x128xbf16>
    %c0_8 = arith.constant 0 : index
    %c0_9 = arith.constant 0 : index
    %28 = vector.load %arg3[%c0_8, %c0_9] : memref<128x128xbf16, #tpu.memory_space<vmem>>, vector<128x128xbf16>
    %cst_10 = arith.constant dense<0.000000e+00> : vector<16x128xf32>
    %29 = tpu.matmul %27, %28, %cst_10 {dimension_numbers = #tpu.dot_dimension_numbers<[1], [0], [0], [1], [0, 0, 1, 1], [], []>} : vector<16x128xbf16>, vector<128x128xbf16>, vector<16x128xf32> -> vector<16x128xf32>
    %c0_11 = arith.constant 0 : index
    %c0_12 = arith.constant 0 : index
    %30 = vector.load %arg4[%c0_11, %c0_12] : memref<1x128xf32, #tpu.memory_space<vmem>>, vector<1x128xf32>
    %31 = vector.shape_cast %30 : vector<1x128xf32> to vector<128xf32>
    %32 = vector.shape_cast %31 : vector<128xf32> to vector<1x128xf32>
    %33 = vector.broadcast %32 : vector<1x128xf32> to vector<16x128xf32>
    %34 = arith.addf %29, %33 : vector<16x128xf32>
    %c0_13 = arith.constant 0 : index
    %c0_14 = arith.constant 0 : index
    %c0_15 = arith.constant 0 : index
    %35 = vector.load %arg5[%c0_13, %c0_14, %c0_15] : memref<1x16x128xf32, #tpu.memory_space<vmem>>, vector<1x16x128xf32>
    %36 = vector.shape_cast %35 : vector<1x16x128xf32> to vector<16x128xf32>
    %37 = vector.shape_cast %34 : vector<16x128xf32> to vector<1x16x128xf32>
    tpu.vector_store %arg5[%c0_13, %c0_14, %c0_15], %37 {strides = array<i32>} : memref<1x16x128xf32, #tpu.memory_space<vmem>>, vector<1x16x128xf32>,
    return
  }
  func.func @transform_0(%arg0: i32) -> (i32, i32, i32) {
    %c0_i32 = arith.constant 0 : i32
    %c0_i32_0 = arith.constant 0 : i32
    %c0_i32_1 = arith.constant 0 : i32
    return %arg0, %c0_i32, %c0_i32_0 : i32, i32, i32
  }
  func.func @transform_1(%arg0: i32) -> (i32, i32) {
    %c0_i32 = arith.constant 0 : i32
    %c0_i32_0 = arith.constant 0 : i32
    %c0_i32_1 = arith.constant 0 : i32
    return %c0_i32, %c0_i32_0 : i32, i32
  }
  func.func @transform_2(%arg0: i32) -> (i32, i32) {
    %c0_i32 = arith.constant 0 : i32
    %c0_i32_0 = arith.constant 0 : i32
    %c0_i32_1 = arith.constant 0 : i32
    return %c0_i32, %c0_i32_0 : i32, i32
  }
  func.func @transform_3(%arg0: i32) -> (i32, i32) {
    %c0_i32 = arith.constant 0 : i32
    %c0_i32_0 = arith.constant 0 : i32
    %c0_i32_1 = arith.constant 0 : i32
    return %c0_i32, %c0_i32_0 : i32, i32
  }
  func.func @transform_4(%arg0: i32) -> (i32, i32, i32) {
    %c0_i32 = arith.constant 0 : i32
    %c0_i32_0 = arith.constant 0 : i32
    %c0_i32_1 = arith.constant 0 : i32
    return %arg0, %c0_i32, %c0_i32_0 : i32, i32, i32
  }
}

</mosaic_0001>

<llo_original>
// kernel: tpu_custom_call.1
$region0: #{tpu_custom_call.1}
  #allocation0 [shape = 'u32[]', space=smem, size = 0x4, offset = 0x4, fixed_abs, tag = 'smem constant byte address 0x4 - core index']
  #allocation1 [shape = 'u32[144,128]{1,0:T(1,128)}', space=vmem, size = 0x12000, scoped, tag = 'internal scratch']
  %s0 = inlined_call_operand.hbm [shape: bf16[2,16,128], index: 0, kind: input, shape index: {}]
  %s1 = inlined_call_operand.hbm [shape: bf16[128,384], index: 1, kind: input, shape index: {}]
  %s2 = inlined_call_operand.hbm [shape: bf16[128,128], index: 2, kind: input, shape index: {}]
  %s3 = inlined_call_operand.vmem [shape: f32[1,128], index: 3, kind: input, shape index: {}]
  %s4 = inlined_call_operand.hbm [shape: f32[2,16,128], index: 4, kind: output, shape index: {}]
  %s5 = sld [smem:[#allocation0]]
  $region61: #{tpu_custom_call.1} parent=0
    _
  %s7 = ssub.s32 1, %s5
  %s8 = scalar_select 0, %s7, %s5
  $region1: #{tpu_custom_call.1} parent=0
    #allocation2 [shape = 'u8[8192]{0}', space=vmem, size = 0x2000, scoped, tag = 'input window, operand 0']
    #allocation3 [shape = 's32[2]{0}', space=sflag, size = 0x8, scoped, tag = 'scoped memory for tpu_custom_call.1']
    #allocation4 [shape = 's32[2]{0}', space=sflag, size = 0x8, scoped, tag = 'scoped memory for tpu_custom_call.1']
    #allocation5 [shape = 'u8[98304]{0}', space=vmem, size = 0x18000, scoped, tag = 'input window, operand 1, single buffered']
    #allocation6 [shape = 's32[1]{0}', space=sflag, size = 0x4, scoped, tag = 'scoped memory for tpu_custom_call.1']
    #allocation7 [shape = 'u8[32768]{0}', space=vmem, size = 0x8000, scoped, tag = 'input window, operand 2, single buffered']
    #allocation8 [shape = 'u8[16384]{0}', space=vmem, size = 0x4000, scoped, tag = 'output window, operand 0']
    %9 = vsyncpa [#allocation3], 0
    %s10 = scalar_lea.sflag [#allocation3], 1
    %11 = vsyncpa %s10, 0
    %12 = vsyncpa [#allocation6], 0
    %13 = vsyncpa [#allocation4], 0
    %s14 = scalar_lea.sflag [#allocation4], 1
    %15 = vsyncpa %s14, 0
    loop: start=0, step=1, limit=4
    $region2: #{tpu_custom_call.1} parent=1 // loop_pre_header
      _
    $region3: #{tpu_custom_call.1} parent=1 // loop_header
      %s17 = sphi 0, %s21
      %p18 = scmp.ge.s32.totalorder %s17, 4
      %s27 = sphi 0, %s29
      %s30 = sphi 0, %s27
      %s31 = sphi 0, %s30
      %s47 = sphi 0, %s31
      %s51 = sphi 0, %s51
      %s53 = sphi 0, %s51
      %s54 = sphi 0, %s53
      %s68 = sphi 0, %s54
      %s72 = sphi 0, %s72
      %s74 = sphi 0, %s72
      %s75 = sphi 0, %s74
      %s89 = sphi 0, %s75
      %s93 = sphi 0, %s93
      %s95 = sphi 0, %s93
      %s96 = sphi 0, %s95
      %s110 = sphi 0, %s96
      %s116 = sphi 0, %s118
      %s119 = sphi 0, %s116
      %s120 = sphi 0, %s119
      %s136 = sphi 0, %s120
    $region4: #{tpu_custom_call.1} parent=1 // loop_header_branch
      %20 = sbr.rel (%p18) target = $region8
    $region5: #{tpu_custom_call.1} parent=1 // loop_body
      %s22 = ssub.s32 %s17, 1
      %s23 = ssub.s32 %s17, 2
      %s24 = sadd.s32 %s17, 1
      %s25 = ssub.s32 %s17, %s24
      %p26 = scmp.eq.s32.totalorder %s25, 0
      %s28 = sadd.s32 %s27, 1
      %s29 = scalar_select %p26, %s27, %s28
      %p32 = pneg %p26
      %p33 = scmp.eq.s32.totalorder %s17, 1
      %p34 = por %p32, %p33
      %p35 = scmp.ne.s32.totalorder %s27, %s30
      %p36 = scmp.eq.s32.totalorder %s17, 0
      %p37 = por %p35, %p36
      %p38 = scmp.ne.s32.totalorder %s27, %s30
      %p39 = scmp.eq.s32.totalorder %s22, 1
      %p40 = por %p38, %p39
      %p41 = scmp.ne.s32.totalorder %s30, %s31
      %p42 = scmp.eq.s32.totalorder %s22, 0
      %p43 = por %p41, %p42
      %p44 = scmp.ne.s32.totalorder %s30, %s31
      %p45 = scmp.eq.s32.totalorder %s23, 1
      %p46 = por %p44, %p45
      %p48 = scmp.ne.s32.totalorder %s31, %s47
      %p49 = scmp.eq.s32.totalorder %s23, 0
      %p50 = por %p48, %p49
      %s52 = sadd.s32 %s51, 1
      %p55 = scmp.eq.s32.totalorder %s17, 1
      %p56 = scmp.ne.s32.totalorder %s51, %s53
      %p57 = scmp.eq.s32.totalorder %s17, 0
      %p58 = por %p56, %p57
      %p59 = scmp.ne.s32.totalorder %s51, %s53
      %p60 = scmp.eq.s32.totalorder %s22, 1
      %p61 = por %p59, %p60
      %p62 = scmp.ne.s32.totalorder %s53, %s54
      %p63 = scmp.eq.s32.totalorder %s22, 0
      %p64 = por %p62, %p63
      %p65 = scmp.ne.s32.totalorder %s53, %s54
      %p66 = scmp.eq.s32.totalorder %s23, 1
      %p67 = por %p65, %p66
      %p69 = scmp.ne.s32.totalorder %s54, %s68
      %p70 = scmp.eq.s32.totalorder %s23, 0
      %p71 = por %p69, %p70
      %s73 = sadd.s32 %s72, 1
      %p76 = scmp.eq.s32.totalorder %s17, 1
      %p77 = scmp.ne.s32.totalorder %s72, %s74
      %p78 = scmp.eq.s32.totalorder %s17, 0
      %p79 = por %p77, %p78
      %p80 = scmp.ne.s32.totalorder %s72, %s74
      %p81 = scmp.eq.s32.totalorder %s22, 1
      %p82 = por %p80, %p81
      %p83 = scmp.ne.s32.totalorder %s74, %s75
      %p84 = scmp.eq.s32.totalorder %s22, 0
      %p85 = por %p83, %p84
      %p86 = scmp.ne.s32.totalorder %s74, %s75
      %p87 = scmp.eq.s32.totalorder %s23, 1
      %p88 = por %p86, %p87
      %p90 = scmp.ne.s32.totalorder %s75, %s89
      %p91 = scmp.eq.s32.totalorder %s23, 0
      %p92 = por %p90, %p91
      %s94 = sadd.s32 %s93, 1
      %p97 = scmp.eq.s32.totalorder %s17, 1
      %p98 = scmp.ne.s32.totalorder %s93, %s95
      %p99 = scmp.eq.s32.totalorder %s17, 0
      %p100 = por %p98, %p99
      %p101 = scmp.ne.s32.totalorder %s93, %s95
      %p102 = scmp.eq.s32.totalorder %s22, 1
      %p103 = por %p101, %p102
      %p104 = scmp.ne.s32.totalorder %s95, %s96
      %p105 = scmp.eq.s32.totalorder %s22, 0
      %p106 = por %p104, %p105
      %p107 = scmp.ne.s32.totalorder %s95, %s96
      %p108 = scmp.eq.s32.totalorder %s23, 1
      %p109 = por %p107, %p108
      %p111 = scmp.ne.s32.totalorder %s96, %s110
      %p112 = scmp.eq.s32.totalorder %s23, 0
      %p113 = por %p111, %p112
      %s114 = ssub.s32 %s17, %s24
      %p115 = scmp.eq.s32.totalorder %s114, 0
      %s117 = sadd.s32 %s116, 1
      %s118 = scalar_select %p115, %s116, %s117
      %p121 = pneg %p115
      %p122 = scmp.eq.s32.totalorder %s17, 1
      %p123 = por %p121, %p122
      %p124 = scmp.ne.s32.totalorder %s116, %s119
      %p125 = scmp.eq.s32.totalorder %s17, 0
      %p126 = por %p124, %p125
      %p127 = scmp.ne.s32.totalorder %s116, %s119
      %p128 = scmp.eq.s32.totalorder %s22, 1
      %p129 = por %p127, %p128
      %p130 = scmp.ne.s32.totalorder %s119, %s120
      %p131 = scmp.eq.s32.totalorder %s22, 0
      %p132 = por %p130, %p131
      %p133 = scmp.ne.s32.totalorder %s119, %s120
      %p134 = scmp.eq.s32.totalorder %s23, 1
      %p135 = por %p133, %p134
      %p137 = scmp.ne.s32.totalorder %s120, %s136
      %p138 = scmp.eq.s32.totalorder %s23, 0
      %p139 = por %p137, %p138
      %p140 = scmp.le.s32.totalorder 1, %s17
      %p141 = scmp.lt.s32.totalorder %s17, 3
      %p142 = pnand %p140, %p141
      %p143 = pneg %p142
      // Predicated region
      $region9: #{tpu_custom_call.1} parent=5 // pred_check
        _
      $region10: #{tpu_custom_call.1} parent=5 // pred_check_branch
        %145 = sbr.rel (%p142) target = $region12
      $region11: #{tpu_custom_call.1} parent=5 // pred_region
        %s146 = ssub.s32 %s17, 1
        // Predicated region
        $region13: #{tpu_custom_call.1} parent=11 // pred_check
          %p147 = pneg %p64
        $region14: #{tpu_custom_call.1} parent=11 // pred_check_branch
          %149 = sbr.rel (%p147) target = $region16
        $region15: #{tpu_custom_call.1} parent=11 // pred_region
          %s151 = ssub.s32 3072, 3072
          %152 = vsyncadd [#allocation6], %s151
          %s153 = sshll.u32 [#allocation5], 4
          %s154 = int_to_ptr.vmem [resolvable:$true] %s153
          %159 = dma.hbm_to_vmem [thread:$0]  %s1, 3072, %s154, [#allocation6], 192, 192, 12
        $region16: #{tpu_custom_call.1} parent=11 // pred_fallthru
          _
        // Predicated region
        $region17: #{tpu_custom_call.1} parent=11 // pred_check
          %p160 = pneg %p85
        $region18: #{tpu_custom_call.1} parent=11 // pred_check_branch
          %162 = sbr.rel (%p160) target = $region20
        $region19: #{tpu_custom_call.1} parent=11 // pred_region
          %s164 = ssub.s32 1024, 1024
          %165 = vsyncadd [#allocation6], %s164
          %s166 = sshll.u32 [#allocation7], 4
          %s167 = int_to_ptr.vmem [resolvable:$true] %s166
          %172 = dma.hbm_to_vmem [thread:$0]  %s2, 1024, %s167, [#allocation6], 64, 64, 4
        $region20: #{tpu_custom_call.1} parent=11 // pred_fallthru
          _
        // Predicated region
        $region21: #{tpu_custom_call.1} parent=11 // pred_check
          %p173 = pneg %p106
        $region22: #{tpu_custom_call.1} parent=11 // pred_check_branch
          %175 = sbr.rel (%p173) target = $region24
        $region23: #{tpu_custom_call.1} parent=11 // pred_region
          _
        $region24: #{tpu_custom_call.1} parent=11 // pred_fallthru
          _
      $region12: #{tpu_custom_call.1} parent=5 // pred_fallthru
        _
      %p176 = scmp.lt.s32.totalorder %s17, 2
      // Predicated region
      $region25: #{tpu_custom_call.1} parent=5 // pred_check
        %p177 = pneg %p176
      $region26: #{tpu_custom_call.1} parent=5 // pred_check_branch
        %179 = sbr.rel (%p177) target = $region28
      $region27: #{tpu_custom_call.1} parent=5 // pred_region
        // Predicated region
        $region29: #{tpu_custom_call.1} parent=27 // pred_check
          %p180 = pneg %p37
        $region30: #{tpu_custom_call.1} parent=27 // pred_check_branch
          %182 = sbr.rel (%p180) target = $region32
        $region31: #{tpu_custom_call.1} parent=27 // pred_region
          %s183 = sand.u32 %s27, 1
          %s184 = scalar_lea.sflag [#allocation3], %s183
          %s185 = sand.u32 %s27, 1
          %s186 = smul.addr %s185, 8
          %s187 = scalar_lea.vmem [#allocation2], %s186
          %s189 = ssub.s32 128, 128
          %190 = vsyncadd %s184, %s189
          %s191 = smul.addr %s17, 2
          %s192 = smul.addr %s191, 64
          %s193 = scalar_lea.hbm %s0, %s192
          %s194 = sshll.u32 %s187, 4
          %s195 = int_to_ptr.vmem [resolvable:$true] %s194
          %200 = dma.hbm_to_vmem [thread:$0]  %s193, 128, %s195, %s184, 64, 64, 4
        $region32: #{tpu_custom_call.1} parent=27 // pred_fallthru
          _
      $region28: #{tpu_custom_call.1} parent=5 // pred_fallthru
        _
      %p201 = scmp.le.s32.totalorder 1, %s17
      %p202 = scmp.lt.s32.totalorder %s17, 3
      %p203 = pnand %p201, %p202
      %p204 = pneg %p203
      // Predicated region
      $region33: #{tpu_custom_call.1} parent=5 // pred_check
        _
      $region34: #{tpu_custom_call.1} parent=5 // pred_check_branch
        %206 = sbr.rel (%p203) target = $region36
      $region35: #{tpu_custom_call.1} parent=5 // pred_region
        %s207 = ssub.s32 %s17, 1
        %s208 = sand.u32 %s30, 1
        %s209 = scalar_lea.sflag [#allocation3], %s208
        %s210 = sand.u32 %s30, 1
        %s211 = smul.addr %s210, 8
        %s212 = scalar_lea.vmem [#allocation2], %s211
        // Predicated region
        $region37: #{tpu_custom_call.1} parent=35 // pred_check
          %p213 = pneg %p43
        $region38: #{tpu_custom_call.1} parent=35 // pred_check_branch
          %215 = sbr.rel (%p213) target = $region40
        $region39: #{tpu_custom_call.1} parent=35 // pred_region
          %216 = dma.done %s209, 128
        $region40: #{tpu_custom_call.1} parent=35 // pred_fallthru
          _
        // Predicated region
        $region41: #{tpu_custom_call.1} parent=35 // pred_check
          %p217 = pneg %p64
        $region42: #{tpu_custom_call.1} parent=35 // pred_check_branch
          %219 = sbr.rel (%p217) target = $region44
        $region43: #{tpu_custom_call.1} parent=35 // pred_region
          %220 = dma.done [#allocation6], 3072
        $region44: #{tpu_custom_call.1} parent=35 // pred_fallthru
          _
        // Predicated region
        $region45: #{tpu_custom_call.1} parent=35 // pred_check
          %p221 = pneg %p85
        $region46: #{tpu_custom_call.1} parent=35 // pred_check_branch
          %223 = sbr.rel (%p221) target = $region48
        $region47: #{tpu_custom_call.1} parent=35 // pred_region
          %224 = dma.done [#allocation6], 1024
        $region48: #{tpu_custom_call.1} parent=35 // pred_fallthru
          _
        %s225 = sand.u32 %s30, 1
        %s226 = scalar_lea.sflag [#allocation3], %s225
        %s227 = sand.u32 %s30, 1
        %s228 = smul.addr %s227, 8
        %s229 = scalar_lea.vmem [#allocation2], %s228
        %p230 = pneg %p43
        %p231 = pneg %p40
        %p232 = pneg %p64
        %p233 = pneg %p61
        %p234 = pneg %p85
        %p235 = pneg %p82
        %p236 = pneg %p106
        %p237 = pneg %p103
        %p238 = pneg %p132
        %p239 = pneg %p129
        %s240 = sand.u32 %s119, 1
        %s241 = scalar_lea.sflag [#allocation4], %s240
        %s242 = sand.u32 %s119, 1
        %s243 = smul.addr %s242, 16
        %s244 = scalar_lea.vmem [#allocation8], %s243
        %v246 = vld [vmem:[%s212] sm:$0xf]
        %v247 = vld [vmem:[%s212 + $0x4] sm:$0xf]
        %v248 = vld [vmem:[#allocation5] sm:$0xff]
        %v249 = vld [vmem:[#allocation5 + $0x8] sm:$0xf]
        %v250 = vld [vmem:[#allocation5 + $0xc] sm:$0xff]
        %v251 = vld [vmem:[#allocation5 + $0x14] sm:$0xf]
        %v252 = vld [vmem:[#allocation5 + $0x18] sm:$0xff]
        %v253 = vld [vmem:[#allocation5 + $0x20] sm:$0xf]
        %v254 = vld [vmem:[#allocation5 + $0x24] sm:$0xff]
        %v255 = vld [vmem:[#allocation5 + $0x2c] sm:$0xf]
        %v256 = vld [vmem:[#allocation5 + $0x30] sm:$0xff]
        %v257 = vld [vmem:[#allocation5 + $0x38] sm:$0xf]
        %v258 = vld [vmem:[#allocation5 + $0x3c] sm:$0xff]
        %v259 = vld [vmem:[#allocation5 + $0x44] sm:$0xf]
        %v260 = vld [vmem:[#allocation5 + $0x48] sm:$0xff]
        %v261 = vld [vmem:[#allocation5 + $0x50] sm:$0xf]
        %v262 = vld [vmem:[#allocation5 + $0x54] sm:$0xff]
        %v263 = vld [vmem:[#allocation5 + $0x5c] sm:$0xf]
        %v264 = vld [vmem:[#allocation5 + $0x60] sm:$0xff]
        %v265 = vld [vmem:[#allocation5 + $0x68] sm:$0xf]
        %v266 = vld [vmem:[#allocation5 + $0x6c] sm:$0xff]
        %v267 = vld [vmem:[#allocation5 + $0x74] sm:$0xf]
        %v268 = vld [vmem:[#allocation5 + $0x78] sm:$0xff]
        %v269 = vld [vmem:[#allocation5 + $0x80] sm:$0xf]
        %v270 = vld [vmem:[#allocation5 + $0x84] sm:$0xff]
        %v271 = vld [vmem:[#allocation5 + $0x8c] sm:$0xf]
        %v272 = vld [vmem:[#allocation5 + $0x90] sm:$0xff]
        %v273 = vld [vmem:[#allocation5 + $0x98] sm:$0xf]
        %v274 = vld [vmem:[#allocation5 + $0x9c] sm:$0xff]
        %v275 = vld [vmem:[#allocation5 + $0xa4] sm:$0xf]
        %v276 = vld [vmem:[#allocation5 + $0xa8] sm:$0xff]
        %v277 = vld [vmem:[#allocation5 + $0xb0] sm:$0xf]
        %v278 = vld [vmem:[#allocation5 + $0xb4] sm:$0xff]
        %v279 = vld [vmem:[#allocation5 + $0xbc] sm:$0xf]
        %v282 = vunpack.c.l.b16 %v246
        %v283 = vunpack.c.l.b16 %v247
        %v284 = vpack.c.b16 %v283, %v282
        %v318 = vunpack.c.l.b16 %v248
        %v319 = vunpack.c.h.b16 %v248
        %v320 = vunpack.c.l.b16 %v249
        %v321 = vunpack.c.l.b16 %v250
        %v322 = vunpack.c.h.b16 %v250
        %v323 = vunpack.c.l.b16 %v251
        %v324 = vunpack.c.l.b16 %v252
        %v325 = vunpack.c.h.b16 %v252
        %v326 = vunpack.c.l.b16 %v253
        %v327 = vunpack.c.l.b16 %v254
        %v328 = vunpack.c.h.b16 %v254
        %v329 = vunpack.c.l.b16 %v255
        %v330 = vunpack.c.l.b16 %v256
        %v331 = vunpack.c.h.b16 %v256
        %v332 = vunpack.c.l.b16 %v257
        %v333 = vunpack.c.l.b16 %v258
        %v334 = vunpack.c.h.b16 %v258
        %v335 = vunpack.c.l.b16 %v259
        %v336 = vunpack.c.l.b16 %v260
        %v337 = vunpack.c.h.b16 %v260
        %v338 = vunpack.c.l.b16 %v261
        %v339 = vunpack.c.l.b16 %v262
        %v340 = vunpack.c.h.b16 %v262
        %v341 = vunpack.c.l.b16 %v263
        %v342 = vunpack.c.l.b16 %v264
        %v343 = vunpack.c.h.b16 %v264
        %v344 = vunpack.c.l.b16 %v265
        %v345 = vunpack.c.l.b16 %v266
        %v346 = vunpack.c.h.b16 %v266
        %v347 = vunpack.c.l.b16 %v267
        %v348 = vunpack.c.l.b16 %v268
        %v349 = vunpack.c.h.b16 %v268
        %v350 = vunpack.c.l.b16 %v269
        %v351 = vunpack.c.l.b16 %v270
        %v352 = vunpack.c.h.b16 %v270
        %v353 = vunpack.c.l.b16 %v271
        %v354 = vunpack.c.l.b16 %v272
        %v355 = vunpack.c.h.b16 %v272
        %v356 = vunpack.c.l.b16 %v273
        %v357 = vunpack.c.l.b16 %v274
        %v358 = vunpack.c.h.b16 %v274
        %v359 = vunpack.c.l.b16 %v275
        %v360 = vunpack.c.l.b16 %v276
        %v361 = vunpack.c.h.b16 %v276
        %v362 = vunpack.c.l.b16 %v277
        %v363 = vunpack.c.l.b16 %v278
        %v364 = vunpack.c.h.b16 %v278
        %v365 = vunpack.c.l.b16 %v279
        %v366 = vpack.c.b16 %v321, %v318
        %v367 = vpack.c.b16 %v322, %v319
        %v368 = vpack.c.b16 %v323, %v320
        %v369 = vpack.c.b16 %v327, %v324
        %v370 = vpack.c.b16 %v328, %v325
        %v371 = vpack.c.b16 %v329, %v326
        %v372 = vpack.c.b16 %v333, %v330
        %v373 = vpack.c.b16 %v334, %v331
        %v374 = vpack.c.b16 %v335, %v332
        %v375 = vpack.c.b16 %v339, %v336
        %v376 = vpack.c.b16 %v340, %v337
        %v377 = vpack.c.b16 %v341, %v338
        %v378 = vpack.c.b16 %v345, %v342
        %v379 = vpack.c.b16 %v346, %v343
        %v380 = vpack.c.b16 %v347, %v344
        %v381 = vpack.c.b16 %v351, %v348
        %v382 = vpack.c.b16 %v352, %v349
        %v383 = vpack.c.b16 %v353, %v350
        %v384 = vpack.c.b16 %v357, %v354
        %v385 = vpack.c.b16 %v358, %v355
        %v386 = vpack.c.b16 %v359, %v356
        %v387 = vpack.c.b16 %v363, %v360
        %v388 = vpack.c.b16 %v364, %v361
        %v389 = vpack.c.b16 %v365, %v362
        %414 = vmatprep.subr.bf16.mxu0 %v367
        %415 = vmatpush1.bf16.msra.mxu0 %v366
        %416 = vmatprep.subr.bf16.mxu0 %v370
        %417 = vmatpush1.bf16.msra.mxu0 %v369
        %418 = vmatprep.subr.bf16.mxu0 %v373
        %419 = vmatpush1.bf16.msra.mxu0 %v372
        %420 = vmatprep.subr.bf16.mxu0 %v376
        %421 = vmatpush1.bf16.msra.mxu0 %v375
        %422 = vmatprep.subr.bf16.mxu0 %v379
        %423 = vmatpush1.bf16.msra.mxu0 %v378
        %424 = vmatprep.subr.bf16.mxu0 %v382
        %425 = vmatpush1.bf16.msra.mxu0 %v381
        %426 = vmatprep.subr.bf16.mxu0 %v385
        %427 = vmatpush1.bf16.msra.mxu0 %v384
        %428 = vmatprep.subr.bf16.mxu0 %v388
        %429 = vmatpush1.bf16.msra.mxu0 %v387
        %430 = vmatprep.subr.bf16.mxu0 0
        %431 = vmatpush1.bf16.msra.mxu0 0
        %432 = vmatprep.subr.bf16.mxu0 0
        %433 = vmatpush1.bf16.msra.mxu0 0
        %434 = vmatprep.subr.bf16.mxu0 0
        %435 = vmatpush1.bf16.msra.mxu0 0
        %436 = vmatprep.subr.bf16.mxu0 0
        %437 = vmatpush1.bf16.msra.mxu0 0
        %438 = vmatprep.subr.bf16.mxu0 0
        %439 = vmatpush1.bf16.msra.mxu0 0
        %440 = vmatprep.subr.bf16.mxu0 0
        %441 = vmatpush1.bf16.msra.mxu0 0
        %442 = vmatprep.subr.bf16.mxu0 0
        %443 = vmatpush1.bf16.msra.mxu0 0
        %444 = vmatprep.subr.bf16.mxu0 0
        %445 = vmatpush1.bf16.msra.mxu0 0
        %446 = vmatprep.mubr.bf16.mxu0 0
        %447 = vmatmul.mubr.bf16.gmra.mrb[0].mxu0 %v284
        %v448 = vpop.f32.mrb[0].mxu0
        %v449 = vadd.f32 0.0, %v448
        %v450 = vpop.f32.mrb[0].mxu0
        %v451 = vadd.f32 0.0, %v450
        %v452 = vpop.f32.mrb[0].mxu0
        %v453 = vadd.f32 0.0, %v452
        %v454 = vpop.f32.mrb[0].mxu0
        %v455 = vadd.f32 0.0, %v454
        %456 = vdwg.mxu0
        %457 = vmatprep.subr.bf16.mxu0 0
        %458 = vmatpush1.bf16.msra.mxu0 %v368
        %459 = vmatprep.subr.bf16.mxu0 0
        %460 = vmatpush1.bf16.msra.mxu0 %v371
        %461 = vmatprep.subr.bf16.mxu0 0
        %462 = vmatpush1.bf16.msra.mxu0 %v374
        %463 = vmatprep.subr.bf16.mxu0 0
        %464 = vmatpush1.bf16.msra.mxu0 %v377
        %465 = vmatprep.subr.bf16.mxu0 0
        %466 = vmatpush1.bf16.msra.mxu0 %v380
        %467 = vmatprep.subr.bf16.mxu0 0
        %468 = vmatpush1.bf16.msra.mxu0 %v383
        %469 = vmatprep.subr.bf16.mxu0 0
        %470 = vmatpush1.bf16.msra.mxu0 %v386
        %471 = vmatprep.subr.bf16.mxu0 0
        %472 = vmatpush1.bf16.msra.mxu0 %v389
        %473 = vmatprep.subr.bf16.mxu0 0
        %474 = vmatpush1.bf16.msra.mxu0 0
        %475 = vmatprep.subr.bf16.mxu0 0
        %476 = vmatpush1.bf16.msra.mxu0 0
        %477 = vmatprep.subr.bf16.mxu0 0
        %478 = vmatpush1.bf16.msra.mxu0 0
        %479 = vmatprep.subr.bf16.mxu0 0
        %480 = vmatpush1.bf16.msra.mxu0 0
        %481 = vmatprep.subr.bf16.mxu0 0
        %482 = vmatpush1.bf16.msra.mxu0 0
        %483 = vmatprep.subr.bf16.mxu0 0
        %484 = vmatpush1.bf16.msra.mxu0 0
        %485 = vmatprep.subr.bf16.mxu0 0
        %486 = vmatpush1.bf16.msra.mxu0 0
        %487 = vmatprep.subr.bf16.mxu0 0
        %488 = vmatpush1.bf16.msra.mxu0 0
        %489 = vmatprep.mubr.bf16.mxu0 0
        %490 = vmatmul.mubr.bf16.gmra.mrb[0].mxu0 %v284
        %v491 = vpop.f32.mrb[0].mxu0
        %v492 = vadd.f32 0.0, %v491
        %v493 = vpop.f32.mrb[0].mxu0
        %v494 = vpop.f32.mrb[0].mxu0
        %v495 = vadd.f32 0.0, %v494
        %v496 = vpop.f32.mrb[0].mxu0
        %497 = vdwg.mxu0
        %500 = vrot.lane.b32.xlu0 %v449, 96
        %v501 = vpop.permute.xlu0 %500
        %502 = vrot.lane.b32.xlu0 %v453, 96
        %v503 = vpop.permute.xlu0 %502
        %506 = vrot.lane.b32.xlu0 %v449, 64
        %v507 = vpop.permute.xlu0 %506
        %508 = vrot.lane.b32.xlu0 %v453, 64
        %v509 = vpop.permute.xlu0 %508
        %512 = vrot.lane.b32.xlu0 %v449, 32
        %v513 = vpop.permute.xlu0 %512
        %514 = vrot.lane.b32.xlu0 %v453, 32
        %v515 = vpop.permute.xlu0 %514
        %v518 = vcombine.low %v449, %v507
        %v519 = vcombine.high %v449, %v507
        %v521 = vunpack.c.l.s4 1983009808
        %v522 = vunpack.c.0.s8 %v521
        %v523 = vlaneseq
        %v524 = vshrl.u32 %v523, 7
        %v525 = vsub.s32 %v522, %v524
        %v526 = vrot.slane %v518, %v525
        %v528 = vunpack.c.l.s4 1983009808
        %v529 = vunpack.c.0.s8 %v528
        %v530 = vlaneseq
        %v531 = vshrl.u32 %v530, 7
        %v532 = vsub.s32 %v529, %v531
        %v533 = vrot.slane %v519, %v532
        %v534 = vcombine.low %v501, %v513
        %v535 = vcombine.high %v501, %v513
        %v537 = vunpack.c.l.s4 1983009808
        %v538 = vunpack.c.0.s8 %v537
        %v539 = vlaneseq
        %v540 = vshrl.u32 %v539, 7
        %v541 = vsub.s32 %v538, %v540
        %v542 = vrot.slane %v534, %v541
        %v544 = vunpack.c.l.s4 1983009808
        %v545 = vunpack.c.0.s8 %v544
        %v546 = vlaneseq
        %v547 = vshrl.u32 %v546, 7
        %v548 = vsub.s32 %v545, %v547
        %v549 = vrot.slane %v535, %v548
        %v550 = vcombine.low %v526, %v542
        %v551 = vcombine.high %v526, %v542
        %v553 = vunpack.c.l.s4 1934713408
        %v554 = vunpack.c.0.s8 %v553
        %v555 = vlaneseq
        %v556 = vshrl.u32 %v555, 7
        %v557 = vsub.s32 %v554, %v556
        %v558 = vrot.slane %v550, %v557
        %v560 = vunpack.c.l.s4 1934713408
        %v561 = vunpack.c.0.s8 %v560
        %v562 = vlaneseq
        %v563 = vshrl.u32 %v562, 7
        %v564 = vsub.s32 %v561, %v563
        %v565 = vrot.slane %v551, %v564
        %v566 = vcombine.low %v533, %v549
        %v567 = vcombine.high %v533, %v549
        %v569 = vunpack.c.l.s4 1934713408
        %v570 = vunpack.c.0.s8 %v569
        %v571 = vlaneseq
        %v572 = vshrl.u32 %v571, 7
        %v573 = vsub.s32 %v570, %v572
        %v574 = vrot.slane %v566, %v573
        %v576 = vunpack.c.l.s4 1934713408
        %v577 = vunpack.c.0.s8 %v576
        %v578 = vlaneseq
        %v579 = vshrl.u32 %v578, 7
        %v580 = vsub.s32 %v577, %v579
        %v581 = vrot.slane %v567, %v580
        %v582 = vcombine.high %v558, 0.0
        %v583 = vcombine.high %v565, 0.0
        %v584 = vcombine.high %v574, 0.0
        %v585 = vcombine.high %v581, 0.0
        %v586 = vcombine.low %v453, %v509
        %v587 = vcombine.high %v453, %v509
        %v589 = vunpack.c.l.s4 1983009808
        %v590 = vunpack.c.0.s8 %v589
        %v591 = vlaneseq
        %v592 = vshrl.u32 %v591, 7
        %v593 = vsub.s32 %v590, %v592
        %v594 = vrot.slane %v586, %v593
        %v596 = vunpack.c.l.s4 1983009808
        %v597 = vunpack.c.0.s8 %v596
        %v598 = vlaneseq
        %v599 = vshrl.u32 %v598, 7
        %v600 = vsub.s32 %v597, %v599
        %v601 = vrot.slane %v587, %v600
        %v602 = vcombine.low %v503, %v515
        %v603 = vcombine.high %v503, %v515
        %v605 = vunpack.c.l.s4 1983009808
        %v606 = vunpack.c.0.s8 %v605
        %v607 = vlaneseq
        %v608 = vshrl.u32 %v607, 7
        %v609 = vsub.s32 %v606, %v608
        %v610 = vrot.slane %v602, %v609
        %v612 = vunpack.c.l.s4 1983009808
        %v613 = vunpack.c.0.s8 %v612
        %v614 = vlaneseq
        %v615 = vshrl.u32 %v614, 7
        %v616 = vsub.s32 %v613, %v615
        %v617 = vrot.slane %v603, %v616
        %v618 = vcombine.low %v594, %v610
        %v619 = vcombine.high %v594, %v610
        %v621 = vunpack.c.l.s4 1934713408
        %v622 = vunpack.c.0.s8 %v621
        %v623 = vlaneseq
        %v624 = vshrl.u32 %v623, 7
        %v625 = vsub.s32 %v622, %v624
        %v626 = vrot.slane %v618, %v625
        %v628 = vunpack.c.l.s4 1934713408
        %v629 = vunpack.c.0.s8 %v628
        %v630 = vlaneseq
        %v631 = vshrl.u32 %v630, 7
        %v632 = vsub.s32 %v629, %v631
        %v633 = vrot.slane %v619, %v632
        %v634 = vcombine.low %v601, %v617
        %v635 = vcombine.high %v601, %v617
        %v637 = vunpack.c.l.s4 1934713408
        %v638 = vunpack.c.0.s8 %v637
        %v639 = vlaneseq
        %v640 = vshrl.u32 %v639, 7
        %v641 = vsub.s32 %v638, %v640
        %v642 = vrot.slane %v634, %v641
        %v644 = vunpack.c.l.s4 1934713408
        %v645 = vunpack.c.0.s8 %v644
        %v646 = vlaneseq
        %v647 = vshrl.u32 %v646, 7
        %v648 = vsub.s32 %v645, %v647
        %v649 = vrot.slane %v635, %v648
        %v650 = vcombine.high %v626, 0.0
        %v651 = vcombine.high %v633, 0.0
        %v652 = vcombine.high %v642, 0.0
        %v653 = vcombine.high %v649, 0.0
        %v654 = vcombine.low %v558, %v565
        %v656 = vunpack.c.l.s4 1983009808
        %v657 = vunpack.c.0.s8 %v656
        %v658 = vlaneseq
        %v659 = vshrl.u32 %v658, 7
        %v660 = vsub.s32 %v657, %v659
        %v661 = vrot.slane %v654, %v660
        %v662 = vcombine.low %v582, %v583
        %v664 = vunpack.c.l.s4 1983009808
        %v665 = vunpack.c.0.s8 %v664
        %v666 = vlaneseq
        %v667 = vshrl.u32 %v666, 7
        %v668 = vsub.s32 %v665, %v667
        %v669 = vrot.slane %v662, %v668
        %v670 = vcombine.low %v574, %v581
        %v672 = vunpack.c.l.s4 1983009808
        %v673 = vunpack.c.0.s8 %v672
        %v674 = vlaneseq
        %v675 = vshrl.u32 %v674, 7
        %v676 = vsub.s32 %v673, %v675
        %v677 = vrot.slane %v670, %v676
        %v678 = vcombine.low %v584, %v585
        %v680 = vunpack.c.l.s4 1983009808
        %v681 = vunpack.c.0.s8 %v680
        %v682 = vlaneseq
        %v683 = vshrl.u32 %v682, 7
        %v684 = vsub.s32 %v681, %v683
        %v685 = vrot.slane %v678, %v684
        %v686 = vcombine.low %v661, %v669
        %v687 = vcombine.high %v661, %v669
        %v689 = vunpack.c.l.s4 1934713408
        %v690 = vunpack.c.0.s8 %v689
        %v691 = vlaneseq
        %v692 = vshrl.u32 %v691, 7
        %v693 = vsub.s32 %v690, %v692
        %v694 = vrot.slane %v686, %v693
        %v696 = vunpack.c.l.s4 1934713408
        %v697 = vunpack.c.0.s8 %v696
        %v698 = vlaneseq
        %v699 = vshrl.u32 %v698, 7
        %v700 = vsub.s32 %v697, %v699
        %v701 = vrot.slane %v687, %v700
        %v702 = vcombine.low %v677, %v685
        %v703 = vcombine.high %v677, %v685
        %v705 = vunpack.c.l.s4 1934713408
        %v706 = vunpack.c.0.s8 %v705
        %v707 = vlaneseq
        %v708 = vshrl.u32 %v707, 7
        %v709 = vsub.s32 %v706, %v708
        %v710 = vrot.slane %v702, %v709
        %v712 = vunpack.c.l.s4 1934713408
        %v713 = vunpack.c.0.s8 %v712
        %v714 = vlaneseq
        %v715 = vshrl.u32 %v714, 7
        %v716 = vsub.s32 %v713, %v715
        %v717 = vrot.slane %v703, %v716
        %v718 = vcombine.low %v694, %v710
        %v719 = vcombine.high %v694, %v710
        %v720 = vcombine.low %v701, %v717
        %v721 = vcombine.high %v701, %v717
        %v722 = vcombine.low %v626, %v633
        %v724 = vunpack.c.l.s4 1983009808
        %v725 = vunpack.c.0.s8 %v724
        %v726 = vlaneseq
        %v727 = vshrl.u32 %v726, 7
        %v728 = vsub.s32 %v725, %v727
        %v729 = vrot.slane %v722, %v728
        %v730 = vcombine.low %v650, %v651
        %v732 = vunpack.c.l.s4 1983009808
        %v733 = vunpack.c.0.s8 %v732
        %v734 = vlaneseq
        %v735 = vshrl.u32 %v734, 7
        %v736 = vsub.s32 %v733, %v735
        %v737 = vrot.slane %v730, %v736
        %v738 = vcombine.low %v642, %v649
        %v740 = vunpack.c.l.s4 1983009808
        %v741 = vunpack.c.0.s8 %v740
        %v742 = vlaneseq
        %v743 = vshrl.u32 %v742, 7
        %v744 = vsub.s32 %v741, %v743
        %v745 = vrot.slane %v738, %v744
        %v746 = vcombine.low %v652, %v653
        %v748 = vunpack.c.l.s4 1983009808
        %v749 = vunpack.c.0.s8 %v748
        %v750 = vlaneseq
        %v751 = vshrl.u32 %v750, 7
        %v752 = vsub.s32 %v749, %v751
        %v753 = vrot.slane %v746, %v752
        %v754 = vcombine.low %v729, %v737
        %v755 = vcombine.high %v729, %v737
        %v757 = vunpack.c.l.s4 1934713408
        %v758 = vunpack.c.0.s8 %v757
        %v759 = vlaneseq
        %v760 = vshrl.u32 %v759, 7
        %v761 = vsub.s32 %v758, %v760
        %v762 = vrot.slane %v754, %v761
        %v764 = vunpack.c.l.s4 1934713408
        %v765 = vunpack.c.0.s8 %v764
        %v766 = vlaneseq
        %v767 = vshrl.u32 %v766, 7
        %v768 = vsub.s32 %v765, %v767
        %v769 = vrot.slane %v755, %v768
        %v770 = vcombine.low %v745, %v753
        %v771 = vcombine.high %v745, %v753
        %v773 = vunpack.c.l.s4 1934713408
        %v774 = vunpack.c.0.s8 %v773
        %v775 = vlaneseq
        %v776 = vshrl.u32 %v775, 7
        %v777 = vsub.s32 %v774, %v776
        %v778 = vrot.slane %v770, %v777
        %v780 = vunpack.c.l.s4 1934713408
        %v781 = vunpack.c.0.s8 %v780
        %v782 = vlaneseq
        %v783 = vshrl.u32 %v782, 7
        %v784 = vsub.s32 %v781, %v783
        %v785 = vrot.slane %v771, %v784
        %v786 = vcombine.low %v762, %v778
        %v787 = vcombine.high %v762, %v778
        %v788 = vcombine.low %v769, %v785
        %v789 = vcombine.high %v769, %v785
        %792 = vrot.lane.b32.xlu0 %v451, 96
        %v793 = vpop.permute.xlu0 %792
        %794 = vrot.lane.b32.xlu0 %v455, 96
        %v795 = vpop.permute.xlu0 %794
        %798 = vrot.lane.b32.xlu0 %v451, 64
        %v799 = vpop.permute.xlu0 %798
        %800 = vrot.lane.b32.xlu0 %v455, 64
        %v801 = vpop.permute.xlu0 %800
        %804 = vrot.lane.b32.xlu0 %v451, 32
        %v805 = vpop.permute.xlu0 %804
        %806 = vrot.lane.b32.xlu0 %v455, 32
        %v807 = vpop.permute.xlu0 %806
        %v810 = vcombine.low %v451, %v799
        %v811 = vcombine.high %v451, %v799
        %v813 = vunpack.c.l.s4 1983009808
        %v814 = vunpack.c.0.s8 %v813
        %v815 = vlaneseq
        %v816 = vshrl.u32 %v815, 7
        %v817 = vsub.s32 %v814, %v816
        %v818 = vrot.slane %v810, %v817
        %v820 = vunpack.c.l.s4 1983009808
        %v821 = vunpack.c.0.s8 %v820
        %v822 = vlaneseq
        %v823 = vshrl.u32 %v822, 7
        %v824 = vsub.s32 %v821, %v823
        %v825 = vrot.slane %v811, %v824
        %v826 = vcombine.low %v793, %v805
        %v827 = vcombine.high %v793, %v805
        %v829 = vunpack.c.l.s4 1983009808
        %v830 = vunpack.c.0.s8 %v829
        %v831 = vlaneseq
        %v832 = vshrl.u32 %v831, 7
        %v833 = vsub.s32 %v830, %v832
        %v834 = vrot.slane %v826, %v833
        %v836 = vunpack.c.l.s4 1983009808
        %v837 = vunpack.c.0.s8 %v836
        %v838 = vlaneseq
        %v839 = vshrl.u32 %v838, 7
        %v840 = vsub.s32 %v837, %v839
        %v841 = vrot.slane %v827, %v840
        %v842 = vcombine.low %v818, %v834
        %v843 = vcombine.high %v818, %v834
        %v845 = vunpack.c.l.s4 1934713408
        %v846 = vunpack.c.0.s8 %v845
        %v847 = vlaneseq
        %v848 = vshrl.u32 %v847, 7
        %v849 = vsub.s32 %v846, %v848
        %v850 = vrot.slane %v842, %v849
        %v852 = vunpack.c.l.s4 1934713408
        %v853 = vunpack.c.0.s8 %v852
        %v854 = vlaneseq
        %v855 = vshrl.u32 %v854, 7
        %v856 = vsub.s32 %v853, %v855
        %v857 = vrot.slane %v843, %v856
        %v858 = vcombine.low %v825, %v841
        %v859 = vcombine.high %v825, %v841
        %v861 = vunpack.c.l.s4 1934713408
        %v862 = vunpack.c.0.s8 %v861
        %v863 = vlaneseq
        %v864 = vshrl.u32 %v863, 7
        %v865 = vsub.s32 %v862, %v864
        %v866 = vrot.slane %v858, %v865
        %v868 = vunpack.c.l.s4 1934713408
        %v869 = vunpack.c.0.s8 %v868
        %v870 = vlaneseq
        %v871 = vshrl.u32 %v870, 7
        %v872 = vsub.s32 %v869, %v871
        %v873 = vrot.slane %v859, %v872
        %v874 = vcombine.high %v850, 0.0
        %v875 = vcombine.high %v857, 0.0
        %v876 = vcombine.high %v866, 0.0
        %v877 = vcombine.high %v873, 0.0
        %v878 = vcombine.low %v455, %v801
        %v879 = vcombine.high %v455, %v801
        %v881 = vunpack.c.l.s4 1983009808
        %v882 = vunpack.c.0.s8 %v881
        %v883 = vlaneseq
        %v884 = vshrl.u32 %v883, 7
        %v885 = vsub.s32 %v882, %v884
        %v886 = vrot.slane %v878, %v885
        %v888 = vunpack.c.l.s4 1983009808
        %v889 = vunpack.c.0.s8 %v888
        %v890 = vlaneseq
        %v891 = vshrl.u32 %v890, 7
        %v892 = vsub.s32 %v889, %v891
        %v893 = vrot.slane %v879, %v892
        %v894 = vcombine.low %v795, %v807
        %v895 = vcombine.high %v795, %v807
        %v897 = vunpack.c.l.s4 1983009808
        %v898 = vunpack.c.0.s8 %v897
        %v899 = vlaneseq
        %v900 = vshrl.u32 %v899, 7
        %v901 = vsub.s32 %v898, %v900
        %v902 = vrot.slane %v894, %v901
        %v904 = vunpack.c.l.s4 1983009808
        %v905 = vunpack.c.0.s8 %v904
        %v906 = vlaneseq
        %v907 = vshrl.u32 %v906, 7
        %v908 = vsub.s32 %v905, %v907
        %v909 = vrot.slane %v895, %v908
        %v910 = vcombine.low %v886, %v902
        %v911 = vcombine.high %v886, %v902
        %v913 = vunpack.c.l.s4 1934713408
        %v914 = vunpack.c.0.s8 %v913
        %v915 = vlaneseq
        %v916 = vshrl.u32 %v915, 7
        %v917 = vsub.s32 %v914, %v916
        %v918 = vrot.slane %v910, %v917
        %v920 = vunpack.c.l.s4 1934713408
        %v921 = vunpack.c.0.s8 %v920
        %v922 = vlaneseq
        %v923 = vshrl.u32 %v922, 7
        %v924 = vsub.s32 %v921, %v923
        %v925 = vrot.slane %v911, %v924
        %v926 = vcombine.low %v893, %v909
        %v927 = vcombine.high %v893, %v909
        %v929 = vunpack.c.l.s4 1934713408
        %v930 = vunpack.c.0.s8 %v929
        %v931 = vlaneseq
        %v932 = vshrl.u32 %v931, 7
        %v933 = vsub.s32 %v930, %v932
        %v934 = vrot.slane %v926, %v933
        %v936 = vunpack.c.l.s4 1934713408
        %v937 = vunpack.c.0.s8 %v936
        %v938 = vlaneseq
        %v939 = vshrl.u32 %v938, 7
        %v940 = vsub.s32 %v937, %v939
        %v941 = vrot.slane %v927, %v940
        %v942 = vcombine.high %v918, 0.0
        %v943 = vcombine.high %v925, 0.0
        %v944 = vcombine.high %v934, 0.0
        %v945 = vcombine.high %v941, 0.0
        %v946 = vcombine.low %v850, %v857
        %v948 = vunpack.c.l.s4 1983009808
        %v949 = vunpack.c.0.s8 %v948
        %v950 = vlaneseq
        %v951 = vshrl.u32 %v950, 7
        %v952 = vsub.s32 %v949, %v951
        %v953 = vrot.slane %v946, %v952
        %v954 = vcombine.low %v874, %v875
        %v956 = vunpack.c.l.s4 1983009808
        %v957 = vunpack.c.0.s8 %v956
        %v958 = vlaneseq
        %v959 = vshrl.u32 %v958, 7
        %v960 = vsub.s32 %v957, %v959
        %v961 = vrot.slane %v954, %v960
        %v962 = vcombine.low %v866, %v873
        %v964 = vunpack.c.l.s4 1983009808
        %v965 = vunpack.c.0.s8 %v964
        %v966 = vlaneseq
        %v967 = vshrl.u32 %v966, 7
        %v968 = vsub.s32 %v965, %v967
        %v969 = vrot.slane %v962, %v968
        %v970 = vcombine.low %v876, %v877
        %v972 = vunpack.c.l.s4 1983009808
        %v973 = vunpack.c.0.s8 %v972
        %v974 = vlaneseq
        %v975 = vshrl.u32 %v974, 7
        %v976 = vsub.s32 %v973, %v975
        %v977 = vrot.slane %v970, %v976
        %v978 = vcombine.low %v953, %v961
        %v979 = vcombine.high %v953, %v961
        %v981 = vunpack.c.l.s4 1934713408
        %v982 = vunpack.c.0.s8 %v981
        %v983 = vlaneseq
        %v984 = vshrl.u32 %v983, 7
        %v985 = vsub.s32 %v982, %v984
        %v986 = vrot.slane %v978, %v985
        %v988 = vunpack.c.l.s4 1934713408
        %v989 = vunpack.c.0.s8 %v988
        %v990 = vlaneseq
        %v991 = vshrl.u32 %v990, 7
        %v992 = vsub.s32 %v989, %v991
        %v993 = vrot.slane %v979, %v992
        %v994 = vcombine.low %v969, %v977
        %v995 = vcombine.high %v969, %v977
        %v997 = vunpack.c.l.s4 1934713408
        %v998 = vunpack.c.0.s8 %v997
        %v999 = vlaneseq
        %v1000 = vshrl.u32 %v999, 7
        %v1001 = vsub.s32 %v998, %v1000
        %v1002 = vrot.slane %v994, %v1001
        %v1004 = vunpack.c.l.s4 1934713408
        %v1005 = vunpack.c.0.s8 %v1004
        %v1006 = vlaneseq
        %v1007 = vshrl.u32 %v1006, 7
        %v1008 = vsub.s32 %v1005, %v1007
        %v1009 = vrot.slane %v995, %v1008
        %v1010 = vcombine.low %v986, %v1002
        %v1011 = vcombine.high %v986, %v1002
        %v1012 = vcombine.low %v993, %v1009
        %v1013 = vcombine.high %v993, %v1009
        %v1014 = vcombine.low %v918, %v925
        %v1016 = vunpack.c.l.s4 1983009808
        %v1017 = vunpack.c.0.s8 %v1016
        %v1018 = vlaneseq
        %v1019 = vshrl.u32 %v1018, 7
        %v1020 = vsub.s32 %v1017, %v1019
        %v1021 = vrot.slane %v1014, %v1020
        %v1022 = vcombine.low %v942, %v943
        %v1024 = vunpack.c.l.s4 1983009808
        %v1025 = vunpack.c.0.s8 %v1024
        %v1026 = vlaneseq
        %v1027 = vshrl.u32 %v1026, 7
        %v1028 = vsub.s32 %v1025, %v1027
        %v1029 = vrot.slane %v1022, %v1028
        %v1030 = vcombine.low %v934, %v941
        %v1032 = vunpack.c.l.s4 1983009808
        %v1033 = vunpack.c.0.s8 %v1032
        %v1034 = vlaneseq
        %v1035 = vshrl.u32 %v1034, 7
        %v1036 = vsub.s32 %v1033, %v1035
        %v1037 = vrot.slane %v1030, %v1036
        %v1038 = vcombine.low %v944, %v945
        %v1040 = vunpack.c.l.s4 1983009808
        %v1041 = vunpack.c.0.s8 %v1040
        %v1042 = vlaneseq
        %v1043 = vshrl.u32 %v1042, 7
        %v1044 = vsub.s32 %v1041, %v1043
        %v1045 = vrot.slane %v1038, %v1044
        %v1046 = vcombine.low %v1021, %v1029
        %v1047 = vcombine.high %v1021, %v1029
        %v1049 = vunpack.c.l.s4 1934713408
        %v1050 = vunpack.c.0.s8 %v1049
        %v1051 = vlaneseq
        %v1052 = vshrl.u32 %v1051, 7
        %v1053 = vsub.s32 %v1050, %v1052
        %v1054 = vrot.slane %v1046, %v1053
        %v1056 = vunpack.c.l.s4 1934713408
        %v1057 = vunpack.c.0.s8 %v1056
        %v1058 = vlaneseq
        %v1059 = vshrl.u32 %v1058, 7
        %v1060 = vsub.s32 %v1057, %v1059
        %v1061 = vrot.slane %v1047, %v1060
        %v1062 = vcombine.low %v1037, %v1045
        %v1063 = vcombine.high %v1037, %v1045
        %v1065 = vunpack.c.l.s4 1934713408
        %v1066 = vunpack.c.0.s8 %v1065
        %v1067 = vlaneseq
        %v1068 = vshrl.u32 %v1067, 7
        %v1069 = vsub.s32 %v1066, %v1068
        %v1070 = vrot.slane %v1062, %v1069
        %v1072 = vunpack.c.l.s4 1934713408
        %v1073 = vunpack.c.0.s8 %v1072
        %v1074 = vlaneseq
        %v1075 = vshrl.u32 %v1074, 7
        %v1076 = vsub.s32 %v1073, %v1075
        %v1077 = vrot.slane %v1063, %v1076
        %v1078 = vcombine.low %v1054, %v1070
        %v1079 = vcombine.high %v1054, %v1070
        %v1080 = vcombine.low %v1061, %v1077
        %v1081 = vcombine.high %v1061, %v1077
        %1084 = vrot.lane.b32.xlu0 %v492, 96
        %v1085 = vpop.permute.xlu0 %1084
        %1086 = vrot.lane.b32.xlu0 %v495, 96
        %v1087 = vpop.permute.xlu0 %1086
        %1090 = vrot.lane.b32.xlu0 %v492, 64
        %v1091 = vpop.permute.xlu0 %1090
        %1092 = vrot.lane.b32.xlu0 %v495, 64
        %v1093 = vpop.permute.xlu0 %1092
        %1096 = vrot.lane.b32.xlu0 %v492, 32
        %v1097 = vpop.permute.xlu0 %1096
        %1098 = vrot.lane.b32.xlu0 %v495, 32
        %v1099 = vpop.permute.xlu0 %1098
        %v1102 = vcombine.low %v492, %v1091
        %v1103 = vcombine.high %v492, %v1091
        %v1105 = vunpack.c.l.s4 1983009808
        %v1106 = vunpack.c.0.s8 %v1105
        %v1107 = vlaneseq
        %v1108 = vshrl.u32 %v1107, 7
        %v1109 = vsub.s32 %v1106, %v1108
        %v1110 = vrot.slane %v1102, %v1109
        %v1112 = vunpack.c.l.s4 1983009808
        %v1113 = vunpack.c.0.s8 %v1112
        %v1114 = vlaneseq
        %v1115 = vshrl.u32 %v1114, 7
        %v1116 = vsub.s32 %v1113, %v1115
        %v1117 = vrot.slane %v1103, %v1116
        %v1118 = vcombine.low %v1085, %v1097
        %v1119 = vcombine.high %v1085, %v1097
        %v1121 = vunpack.c.l.s4 1983009808
        %v1122 = vunpack.c.0.s8 %v1121
        %v1123 = vlaneseq
        %v1124 = vshrl.u32 %v1123, 7
        %v1125 = vsub.s32 %v1122, %v1124
        %v1126 = vrot.slane %v1118, %v1125
        %v1128 = vunpack.c.l.s4 1983009808
        %v1129 = vunpack.c.0.s8 %v1128
        %v1130 = vlaneseq
        %v1131 = vshrl.u32 %v1130, 7
        %v1132 = vsub.s32 %v1129, %v1131
        %v1133 = vrot.slane %v1119, %v1132
        %v1134 = vcombine.low %v1110, %v1126
        %v1135 = vcombine.high %v1110, %v1126
        %v1137 = vunpack.c.l.s4 1934713408
        %v1138 = vunpack.c.0.s8 %v1137
        %v1139 = vlaneseq
        %v1140 = vshrl.u32 %v1139, 7
        %v1141 = vsub.s32 %v1138, %v1140
        %v1142 = vrot.slane %v1134, %v1141
        %v1144 = vunpack.c.l.s4 1934713408
        %v1145 = vunpack.c.0.s8 %v1144
        %v1146 = vlaneseq
        %v1147 = vshrl.u32 %v1146, 7
        %v1148 = vsub.s32 %v1145, %v1147
        %v1149 = vrot.slane %v1135, %v1148
        %v1150 = vcombine.low %v1117, %v1133
        %v1151 = vcombine.high %v1117, %v1133
        %v1153 = vunpack.c.l.s4 1934713408
        %v1154 = vunpack.c.0.s8 %v1153
        %v1155 = vlaneseq
        %v1156 = vshrl.u32 %v1155, 7
        %v1157 = vsub.s32 %v1154, %v1156
        %v1158 = vrot.slane %v1150, %v1157
        %v1160 = vunpack.c.l.s4 1934713408
        %v1161 = vunpack.c.0.s8 %v1160
        %v1162 = vlaneseq
        %v1163 = vshrl.u32 %v1162, 7
        %v1164 = vsub.s32 %v1161, %v1163
        %v1165 = vrot.slane %v1151, %v1164
        %v1166 = vcombine.high %v1142, 0.0
        %v1167 = vcombine.high %v1149, 0.0
        %v1168 = vcombine.high %v1158, 0.0
        %v1169 = vcombine.high %v1165, 0.0
        %v1170 = vcombine.low %v495, %v1093
        %v1171 = vcombine.high %v495, %v1093
        %v1173 = vunpack.c.l.s4 1983009808
        %v1174 = vunpack.c.0.s8 %v1173
        %v1175 = vlaneseq
        %v1176 = vshrl.u32 %v1175, 7
        %v1177 = vsub.s32 %v1174, %v1176
        %v1178 = vrot.slane %v1170, %v1177
        %v1180 = vunpack.c.l.s4 1983009808
        %v1181 = vunpack.c.0.s8 %v1180
        %v1182 = vlaneseq
        %v1183 = vshrl.u32 %v1182, 7
        %v1184 = vsub.s32 %v1181, %v1183
        %v1185 = vrot.slane %v1171, %v1184
        %v1186 = vcombine.low %v1087, %v1099
        %v1187 = vcombine.high %v1087, %v1099
        %v1189 = vunpack.c.l.s4 1983009808
        %v1190 = vunpack.c.0.s8 %v1189
        %v1191 = vlaneseq
        %v1192 = vshrl.u32 %v1191, 7
        %v1193 = vsub.s32 %v1190, %v1192
        %v1194 = vrot.slane %v1186, %v1193
        %v1196 = vunpack.c.l.s4 1983009808
        %v1197 = vunpack.c.0.s8 %v1196
        %v1198 = vlaneseq
        %v1199 = vshrl.u32 %v1198, 7
        %v1200 = vsub.s32 %v1197, %v1199
        %v1201 = vrot.slane %v1187, %v1200
        %v1202 = vcombine.low %v1178, %v1194
        %v1203 = vcombine.high %v1178, %v1194
        %v1205 = vunpack.c.l.s4 1934713408
        %v1206 = vunpack.c.0.s8 %v1205
        %v1207 = vlaneseq
        %v1208 = vshrl.u32 %v1207, 7
        %v1209 = vsub.s32 %v1206, %v1208
        %v1210 = vrot.slane %v1202, %v1209
        %v1212 = vunpack.c.l.s4 1934713408
        %v1213 = vunpack.c.0.s8 %v1212
        %v1214 = vlaneseq
        %v1215 = vshrl.u32 %v1214, 7
        %v1216 = vsub.s32 %v1213, %v1215
        %v1217 = vrot.slane %v1203, %v1216
        %v1218 = vcombine.low %v1185, %v1201
        %v1219 = vcombine.high %v1185, %v1201
        %v1221 = vunpack.c.l.s4 1934713408
        %v1222 = vunpack.c.0.s8 %v1221
        %v1223 = vlaneseq
        %v1224 = vshrl.u32 %v1223, 7
        %v1225 = vsub.s32 %v1222, %v1224
        %v1226 = vrot.slane %v1218, %v1225
        %v1228 = vunpack.c.l.s4 1934713408
        %v1229 = vunpack.c.0.s8 %v1228
        %v1230 = vlaneseq
        %v1231 = vshrl.u32 %v1230, 7
        %v1232 = vsub.s32 %v1229, %v1231
        %v1233 = vrot.slane %v1219, %v1232
        %v1234 = vcombine.high %v1210, 0.0
        %v1235 = vcombine.high %v1217, 0.0
        %v1236 = vcombine.high %v1226, 0.0
        %v1237 = vcombine.high %v1233, 0.0
        %v1238 = vcombine.low %v1142, %v1149
        %v1240 = vunpack.c.l.s4 1983009808
        %v1241 = vunpack.c.0.s8 %v1240
        %v1242 = vlaneseq
        %v1243 = vshrl.u32 %v1242, 7
        %v1244 = vsub.s32 %v1241, %v1243
        %v1245 = vrot.slane %v1238, %v1244
        %v1246 = vcombine.low %v1166, %v1167
        %v1248 = vunpack.c.l.s4 1983009808
        %v1249 = vunpack.c.0.s8 %v1248
        %v1250 = vlaneseq
        %v1251 = vshrl.u32 %v1250, 7
        %v1252 = vsub.s32 %v1249, %v1251
        %v1253 = vrot.slane %v1246, %v1252
        %v1254 = vcombine.low %v1158, %v1165
        %v1256 = vunpack.c.l.s4 1983009808
        %v1257 = vunpack.c.0.s8 %v1256
        %v1258 = vlaneseq
        %v1259 = vshrl.u32 %v1258, 7
        %v1260 = vsub.s32 %v1257, %v1259
        %v1261 = vrot.slane %v1254, %v1260
        %v1262 = vcombine.low %v1168, %v1169
        %v1264 = vunpack.c.l.s4 1983009808
        %v1265 = vunpack.c.0.s8 %v1264
        %v1266 = vlaneseq
        %v1267 = vshrl.u32 %v1266, 7
        %v1268 = vsub.s32 %v1265, %v1267
        %v1269 = vrot.slane %v1262, %v1268
        %v1270 = vcombine.low %v1245, %v1253
        %v1271 = vcombine.high %v1245, %v1253
        %v1273 = vunpack.c.l.s4 1934713408
        %v1274 = vunpack.c.0.s8 %v1273
        %v1275 = vlaneseq
        %v1276 = vshrl.u32 %v1275, 7
        %v1277 = vsub.s32 %v1274, %v1276
        %v1278 = vrot.slane %v1270, %v1277
        %v1280 = vunpack.c.l.s4 1934713408
        %v1281 = vunpack.c.0.s8 %v1280
        %v1282 = vlaneseq
        %v1283 = vshrl.u32 %v1282, 7
        %v1284 = vsub.s32 %v1281, %v1283
        %v1285 = vrot.slane %v1271, %v1284
        %v1286 = vcombine.low %v1261, %v1269
        %v1287 = vcombine.high %v1261, %v1269
        %v1289 = vunpack.c.l.s4 1934713408
        %v1290 = vunpack.c.0.s8 %v1289
        %v1291 = vlaneseq
        %v1292 = vshrl.u32 %v1291, 7
        %v1293 = vsub.s32 %v1290, %v1292
        %v1294 = vrot.slane %v1286, %v1293
        %v1296 = vunpack.c.l.s4 1934713408
        %v1297 = vunpack.c.0.s8 %v1296
        %v1298 = vlaneseq
        %v1299 = vshrl.u32 %v1298, 7
        %v1300 = vsub.s32 %v1297, %v1299
        %v1301 = vrot.slane %v1287, %v1300
        %v1302 = vcombine.low %v1278, %v1294
        %v1303 = vcombine.high %v1278, %v1294
        %v1304 = vcombine.low %v1285, %v1301
        %v1305 = vcombine.high %v1285, %v1301
        %v1306 = vcombine.low %v1210, %v1217
        %v1308 = vunpack.c.l.s4 1983009808
        %v1309 = vunpack.c.0.s8 %v1308
        %v1310 = vlaneseq
        %v1311 = vshrl.u32 %v1310, 7
        %v1312 = vsub.s32 %v1309, %v1311
        %v1313 = vrot.slane %v1306, %v1312
        %v1314 = vcombine.low %v1234, %v1235
        %v1316 = vunpack.c.l.s4 1983009808
        %v1317 = vunpack.c.0.s8 %v1316
        %v1318 = vlaneseq
        %v1319 = vshrl.u32 %v1318, 7
        %v1320 = vsub.s32 %v1317, %v1319
        %v1321 = vrot.slane %v1314, %v1320
        %v1322 = vcombine.low %v1226, %v1233
        %v1324 = vunpack.c.l.s4 1983009808
        %v1325 = vunpack.c.0.s8 %v1324
        %v1326 = vlaneseq
        %v1327 = vshrl.u32 %v1326, 7
        %v1328 = vsub.s32 %v1325, %v1327
        %v1329 = vrot.slane %v1322, %v1328
        %v1330 = vcombine.low %v1236, %v1237
        %v1332 = vunpack.c.l.s4 1983009808
        %v1333 = vunpack.c.0.s8 %v1332
        %v1334 = vlaneseq
        %v1335 = vshrl.u32 %v1334, 7
        %v1336 = vsub.s32 %v1333, %v1335
        %v1337 = vrot.slane %v1330, %v1336
        %v1338 = vcombine.low %v1313, %v1321
        %v1339 = vcombine.high %v1313, %v1321
        %v1341 = vunpack.c.l.s4 1934713408
        %v1342 = vunpack.c.0.s8 %v1341
        %v1343 = vlaneseq
        %v1344 = vshrl.u32 %v1343, 7
        %v1345 = vsub.s32 %v1342, %v1344
        %v1346 = vrot.slane %v1338, %v1345
        %v1348 = vunpack.c.l.s4 1934713408
        %v1349 = vunpack.c.0.s8 %v1348
        %v1350 = vlaneseq
        %v1351 = vshrl.u32 %v1350, 7
        %v1352 = vsub.s32 %v1349, %v1351
        %v1353 = vrot.slane %v1339, %v1352
        %v1354 = vcombine.low %v1329, %v1337
        %v1355 = vcombine.high %v1329, %v1337
        %v1357 = vunpack.c.l.s4 1934713408
        %v1358 = vunpack.c.0.s8 %v1357
        %v1359 = vlaneseq
        %v1360 = vshrl.u32 %v1359, 7
        %v1361 = vsub.s32 %v1358, %v1360
        %v1362 = vrot.slane %v1354, %v1361
        %v1364 = vunpack.c.l.s4 1934713408
        %v1365 = vunpack.c.0.s8 %v1364
        %v1366 = vlaneseq
        %v1367 = vshrl.u32 %v1366, 7
        %v1368 = vsub.s32 %v1365, %v1367
        %v1369 = vrot.slane %v1355, %v1368
        %v1370 = vcombine.low %v1346, %v1362
        %v1371 = vcombine.high %v1346, %v1362
        %v1372 = vcombine.low %v1353, %v1369
        %v1373 = vcombine.high %v1353, %v1369
        %vm1374 = vcmask 261120
        %v1376 = vsel %vm1374, %v718, 0
        %v1379 = vsel %vm1374, %v786, 0
        %v1382 = vsel %vm1374, %v1010, 0
        %v1385 = vsel %vm1374, %v1078, 0
        %1387 = vmatprep.subr.mxu0 0.0
        %1388 = vmatpush1.xpose.msra.mxu0 %v1382
        %1389 = vmatprep.subr.mxu0 0.0
        %1390 = vmatpush1.xpose.msra.mxu0 %v1385
        %1391 = vmatprep.subr.mxu0 0.0
        %1392 = vmatpush1.xpose.msra.mxu0 0.0
        %1393 = vmatprep.subr.mxu0 0.0
        %1394 = vmatpush1.xpose.msra.mxu0 0.0
        %1395 = vmatprep.subr.mxu0 0.0
        %1396 = vmatpush1.xpose.msra.mxu0 0.0
        %1397 = vmatprep.subr.mxu0 0.0
        %1398 = vmatpush1.xpose.msra.mxu0 0.0
        %1399 = vmatprep.subr.mxu0 0.0
        %1400 = vmatpush1.xpose.msra.mxu0 0.0
        %1401 = vmatprep.subr.mxu0 0.0
        %1402 = vmatpush1.xpose.msra.mxu0 0.0
        %1403 = vmatprep.subr.mxu0 0.0
        %1404 = vmatpush1.xpose.msra.mxu0 0.0
        %1405 = vmatprep.subr.mxu0 0.0
        %1406 = vmatpush1.xpose.msra.mxu0 0.0
        %1407 = vmatprep.subr.mxu0 0.0
        %1408 = vmatpush1.xpose.msra.mxu0 0.0
        %1409 = vmatprep.subr.mxu0 0.0
        %1410 = vmatpush1.xpose.msra.mxu0 0.0
        %1411 = vmatprep.subr.mxu0 0.0
        %1412 = vmatpush1.xpose.msra.mxu0 0.0
        %1413 = vmatprep.subr.mxu0 0.0
        %1414 = vmatpush1.xpose.msra.mxu0 0.0
        %1415 = vmatprep.subr.mxu0 0.0
        %1416 = vmatpush1.xpose.msra.mxu0 0.0
        %1417 = vmatprep.subr.mxu0 0.0
        %1418 = vmatpush1.xpose.msra.mxu0 0.0
        %1419 = vmatprep.subr.mxu0 0.0
        %1420 = vmatpush1.xpose.msra.mxu0 0.0
        %1421 = vmatprep.subr.mxu0 0.0
        %1422 = vmatpush1.xpose.msra.mxu0 0.0
        %1423 = vmatprep.subr.mxu0 0.0
        %1424 = vmatpush1.xpose.msra.mxu0 0.0
        %1425 = vmatprep.subr.mxu0 0.0
        %1426 = vmatpush1.xpose.msra.mxu0 0.0
        %1427 = vmatprep.subr.mxu0 0.0
        %1428 = vmatpush1.xpose.msra.mxu0 0.0
        %1429 = vmatprep.subr.mxu0 0.0
        %1430 = vmatpush1.xpose.msra.mxu0 0.0
        %1431 = vmatprep.subr.mxu0 0.0
        %1432 = vmatpush1.xpose.msra.mxu0 0.0
        %1433 = vmatprep.subr.mxu0 0.0
        %1434 = vmatpush1.xpose.msra.mxu0 0.0
        %1435 = vmatprep.subr.mxu0 0.0
        %1436 = vmatpush1.xpose.msra.mxu0 0.0
        %1437 = vmatprep.subr.mxu0 0.0
        %1438 = vmatpush1.xpose.msra.mxu0 0.0
        %1439 = vmatprep.subr.mxu0 0.0
        %1440 = vmatpush1.xpose.msra.mxu0 0.0
        %1441 = vmatprep.subr.mxu0 0.0
        %1442 = vmatpush1.xpose.msra.mxu0 0.0
        %1443 = vmatprep.subr.mxu0 0.0
        %1444 = vmatpush1.xpose.msra.mxu0 0.0
        %1445 = vmatprep.subr.mxu0 0.0
        %1446 = vmatpush1.xpose.msra.mxu0 0.0
        %1447 = vmatprep.subr.mxu0 0.0
        %1448 = vmatpush1.xpose.msra.mxu0 0.0
        %1449 = vmatprep.subr.mxu0 0.0
        %1450 = vmatpush1.xpose.msra.mxu0 0.0
        %1451 = vmatprep.mubr.f32.mxu0 0.0
        %1452 = vmatmul.mubr.f32.gmra.mrb[0].mxu0 %v1376
        %v1453 = vpop.f32.mrb[0].mxu0
        %v1454 = vadd.f32 0.0, %v1453
        %v1455 = vpop.f32.mrb[0].mxu0
        %1456 = vmatprep.mubr.f32.mxu0 0.0
        %1457 = vmatmul.mubr.f32.gmra.mrb[0].mxu0 %v1379
        %v1458 = vpop.f32.mrb[0].mxu0
        %v1459 = vadd.f32 0.0, %v1458
        %v1460 = vpop.f32.mrb[0].mxu0
        %1461 = vdwg.mxu0
        %v1463 = vsel %vm1374, %v719, 0
        %v1466 = vsel %vm1374, %v787, 0
        %v1469 = vsel %vm1374, %v1011, 0
        %v1472 = vsel %vm1374, %v1079, 0
        %1474 = vmatprep.subr.mxu0 0.0
        %1475 = vmatpush1.xpose.msra.mxu0 %v1469
        %1476 = vmatprep.subr.mxu0 0.0
        %1477 = vmatpush1.xpose.msra.mxu0 %v1472
        %1478 = vmatprep.subr.mxu0 0.0
        %1479 = vmatpush1.xpose.msra.mxu0 0.0
        %1480 = vmatprep.subr.mxu0 0.0
        %1481 = vmatpush1.xpose.msra.mxu0 0.0
        %1482 = vmatprep.subr.mxu0 0.0
        %1483 = vmatpush1.xpose.msra.mxu0 0.0
        %1484 = vmatprep.subr.mxu0 0.0
        %1485 = vmatpush1.xpose.msra.mxu0 0.0
        %1486 = vmatprep.subr.mxu0 0.0
        %1487 = vmatpush1.xpose.msra.mxu0 0.0
        %1488 = vmatprep.subr.mxu0 0.0
        %1489 = vmatpush1.xpose.msra.mxu0 0.0
        %1490 = vmatprep.subr.mxu0 0.0
        %1491 = vmatpush1.xpose.msra.mxu0 0.0
        %1492 = vmatprep.subr.mxu0 0.0
        %1493 = vmatpush1.xpose.msra.mxu0 0.0
        %1494 = vmatprep.subr.mxu0 0.0
        %1495 = vmatpush1.xpose.msra.mxu0 0.0
        %1496 = vmatprep.subr.mxu0 0.0
        %1497 = vmatpush1.xpose.msra.mxu0 0.0
        %1498 = vmatprep.subr.mxu0 0.0
        %1499 = vmatpush1.xpose.msra.mxu0 0.0
        %1500 = vmatprep.subr.mxu0 0.0
        %1501 = vmatpush1.xpose.msra.mxu0 0.0
        %1502 = vmatprep.subr.mxu0 0.0
        %1503 = vmatpush1.xpose.msra.mxu0 0.0
        %1504 = vmatprep.subr.mxu0 0.0
        %1505 = vmatpush1.xpose.msra.mxu0 0.0
        %1506 = vmatprep.subr.mxu0 0.0
        %1507 = vmatpush1.xpose.msra.mxu0 0.0
        %1508 = vmatprep.subr.mxu0 0.0
        %1509 = vmatpush1.xpose.msra.mxu0 0.0
        %1510 = vmatprep.subr.mxu0 0.0
        %1511 = vmatpush1.xpose.msra.mxu0 0.0
        %1512 = vmatprep.subr.mxu0 0.0
        %1513 = vmatpush1.xpose.msra.mxu0 0.0
        %1514 = vmatprep.subr.mxu0 0.0
        %1515 = vmatpush1.xpose.msra.mxu0 0.0
        %1516 = vmatprep.subr.mxu0 0.0
        %1517 = vmatpush1.xpose.msra.mxu0 0.0
        %1518 = vmatprep.subr.mxu0 0.0
        %1519 = vmatpush1.xpose.msra.mxu0 0.0
        %1520 = vmatprep.subr.mxu0 0.0
        %1521 = vmatpush1.xpose.msra.mxu0 0.0
        %1522 = vmatprep.subr.mxu0 0.0
        %1523 = vmatpush1.xpose.msra.mxu0 0.0
        %1524 = vmatprep.subr.mxu0 0.0
        %1525 = vmatpush1.xpose.msra.mxu0 0.0
        %1526 = vmatprep.subr.mxu0 0.0
        %1527 = vmatpush1.xpose.msra.mxu0 0.0
        %1528 = vmatprep.subr.mxu0 0.0
        %1529 = vmatpush1.xpose.msra.mxu0 0.0
        %1530 = vmatprep.subr.mxu0 0.0
        %1531 = vmatpush1.xpose.msra.mxu0 0.0
        %1532 = vmatprep.subr.mxu0 0.0
        %1533 = vmatpush1.xpose.msra.mxu0 0.0
        %1534 = vmatprep.subr.mxu0 0.0
        %1535 = vmatpush1.xpose.msra.mxu0 0.0
        %1536 = vmatprep.subr.mxu0 0.0
        %1537 = vmatpush1.xpose.msra.mxu0 0.0
        %1538 = vmatprep.mubr.f32.mxu0 0.0
        %1539 = vmatmul.mubr.f32.gmra.mrb[0].mxu0 %v1463
        %v1540 = vpop.f32.mrb[0].mxu0
        %v1541 = vadd.f32 0.0, %v1540
        %v1542 = vpop.f32.mrb[0].mxu0
        %1543 = vmatprep.mubr.f32.mxu0 0.0
        %1544 = vmatmul.mubr.f32.gmra.mrb[0].mxu0 %v1466
        %v1545 = vpop.f32.mrb[0].mxu0
        %v1546 = vadd.f32 0.0, %v1545
        %v1547 = vpop.f32.mrb[0].mxu0
        %1548 = vdwg.mxu0
        %v1550 = vsel %vm1374, %v720, 0
        %v1553 = vsel %vm1374, %v788, 0
        %v1556 = vsel %vm1374, %v1012, 0
        %v1559 = vsel %vm1374, %v1080, 0
        %1561 = vmatprep.subr.mxu0 0.0
        %1562 = vmatpush1.xpose.msra.mxu0 %v1556
        %1563 = vmatprep.subr.mxu0 0.0
        %1564 = vmatpush1.xpose.msra.mxu0 %v1559
        %1565 = vmatprep.subr.mxu0 0.0
        %1566 = vmatpush1.xpose.msra.mxu0 0.0
        %1567 = vmatprep.subr.mxu0 0.0
        %1568 = vmatpush1.xpose.msra.mxu0 0.0
        %1569 = vmatprep.subr.mxu0 0.0
        %1570 = vmatpush1.xpose.msra.mxu0 0.0
        %1571 = vmatprep.subr.mxu0 0.0
        %1572 = vmatpush1.xpose.msra.mxu0 0.0
        %1573 = vmatprep.subr.mxu0 0.0
        %1574 = vmatpush1.xpose.msra.mxu0 0.0
        %1575 = vmatprep.subr.mxu0 0.0
        %1576 = vmatpush1.xpose.msra.mxu0 0.0
        %1577 = vmatprep.subr.mxu0 0.0
        %1578 = vmatpush1.xpose.msra.mxu0 0.0
        %1579 = vmatprep.subr.mxu0 0.0
        %1580 = vmatpush1.xpose.msra.mxu0 0.0
        %1581 = vmatprep.subr.mxu0 0.0
        %1582 = vmatpush1.xpose.msra.mxu0 0.0
        %1583 = vmatprep.subr.mxu0 0.0
        %1584 = vmatpush1.xpose.msra.mxu0 0.0
        %1585 = vmatprep.subr.mxu0 0.0
        %1586 = vmatpush1.xpose.msra.mxu0 0.0
        %1587 = vmatprep.subr.mxu0 0.0
        %1588 = vmatpush1.xpose.msra.mxu0 0.0
        %1589 = vmatprep.subr.mxu0 0.0
        %1590 = vmatpush1.xpose.msra.mxu0 0.0
        %1591 = vmatprep.subr.mxu0 0.0
        %1592 = vmatpush1.xpose.msra.mxu0 0.0
        %1593 = vmatprep.subr.mxu0 0.0
        %1594 = vmatpush1.xpose.msra.mxu0 0.0
        %1595 = vmatprep.subr.mxu0 0.0
        %1596 = vmatpush1.xpose.msra.mxu0 0.0
        %1597 = vmatprep.subr.mxu0 0.0
        %1598 = vmatpush1.xpose.msra.mxu0 0.0
        %1599 = vmatprep.subr.mxu0 0.0
        %1600 = vmatpush1.xpose.msra.mxu0 0.0
        %1601 = vmatprep.subr.mxu0 0.0
        %1602 = vmatpush1.xpose.msra.mxu0 0.0
        %1603 = vmatprep.subr.mxu0 0.0
        %1604 = vmatpush1.xpose.msra.mxu0 0.0
        %1605 = vmatprep.subr.mxu0 0.0
        %1606 = vmatpush1.xpose.msra.mxu0 0.0
        %1607 = vmatprep.subr.mxu0 0.0
        %1608 = vmatpush1.xpose.msra.mxu0 0.0
        %1609 = vmatprep.subr.mxu0 0.0
        %1610 = vmatpush1.xpose.msra.mxu0 0.0
        %1611 = vmatprep.subr.mxu0 0.0
        %1612 = vmatpush1.xpose.msra.mxu0 0.0
        %1613 = vmatprep.subr.mxu0 0.0
        %1614 = vmatpush1.xpose.msra.mxu0 0.0
        %1615 = vmatprep.subr.mxu0 0.0
        %1616 = vmatpush1.xpose.msra.mxu0 0.0
        %1617 = vmatprep.subr.mxu0 0.0
        %1618 = vmatpush1.xpose.msra.mxu0 0.0
        %1619 = vmatprep.subr.mxu0 0.0
        %1620 = vmatpush1.xpose.msra.mxu0 0.0
        %1621 = vmatprep.subr.mxu0 0.0
        %1622 = vmatpush1.xpose.msra.mxu0 0.0
        %1623 = vmatprep.subr.mxu0 0.0
        %1624 = vmatpush1.xpose.msra.mxu0 0.0
        %1625 = vmatprep.mubr.f32.mxu0 0.0
        %1626 = vmatmul.mubr.f32.gmra.mrb[0].mxu0 %v1550
        %v1627 = vpop.f32.mrb[0].mxu0
        %v1628 = vadd.f32 0.0, %v1627
        %v1629 = vpop.f32.mrb[0].mxu0
        %1630 = vmatprep.mubr.f32.mxu0 0.0
        %1631 = vmatmul.mubr.f32.gmra.mrb[0].mxu0 %v1553
        %v1632 = vpop.f32.mrb[0].mxu0
        %v1633 = vadd.f32 0.0, %v1632
        %v1634 = vpop.f32.mrb[0].mxu0
        %1635 = vdwg.mxu0
        %v1637 = vsel %vm1374, %v721, 0
        %v1640 = vsel %vm1374, %v789, 0
        %v1643 = vsel %vm1374, %v1013, 0
        %v1646 = vsel %vm1374, %v1081, 0
        %1648 = vmatprep.subr.mxu0 0.0
        %1649 = vmatpush1.xpose.msra.mxu0 %v1643
        %1650 = vmatprep.subr.mxu0 0.0
        %1651 = vmatpush1.xpose.msra.mxu0 %v1646
        %1652 = vmatprep.subr.mxu0 0.0
        %1653 = vmatpush1.xpose.msra.mxu0 0.0
        %1654 = vmatprep.subr.mxu0 0.0
        %1655 = vmatpush1.xpose.msra.mxu0 0.0
        %1656 = vmatprep.subr.mxu0 0.0
        %1657 = vmatpush1.xpose.msra.mxu0 0.0
        %1658 = vmatprep.subr.mxu0 0.0
        %1659 = vmatpush1.xpose.msra.mxu0 0.0
        %1660 = vmatprep.subr.mxu0 0.0
        %1661 = vmatpush1.xpose.msra.mxu0 0.0
        %1662 = vmatprep.subr.mxu0 0.0
        %1663 = vmatpush1.xpose.msra.mxu0 0.0
        %1664 = vmatprep.subr.mxu0 0.0
        %1665 = vmatpush1.xpose.msra.mxu0 0.0
        %1666 = vmatprep.subr.mxu0 0.0
        %1667 = vmatpush1.xpose.msra.mxu0 0.0
        %1668 = vmatprep.subr.mxu0 0.0
        %1669 = vmatpush1.xpose.msra.mxu0 0.0
        %1670 = vmatprep.subr.mxu0 0.0
        %1671 = vmatpush1.xpose.msra.mxu0 0.0
        %1672 = vmatprep.subr.mxu0 0.0
        %1673 = vmatpush1.xpose.msra.mxu0 0.0
        %1674 = vmatprep.subr.mxu0 0.0
        %1675 = vmatpush1.xpose.msra.mxu0 0.0
        %1676 = vmatprep.subr.mxu0 0.0
        %1677 = vmatpush1.xpose.msra.mxu0 0.0
        %1678 = vmatprep.subr.mxu0 0.0
        %1679 = vmatpush1.xpose.msra.mxu0 0.0
        %1680 = vmatprep.subr.mxu0 0.0
        %1681 = vmatpush1.xpose.msra.mxu0 0.0
        %1682 = vmatprep.subr.mxu0 0.0
        %1683 = vmatpush1.xpose.msra.mxu0 0.0
        %1684 = vmatprep.subr.mxu0 0.0
        %1685 = vmatpush1.xpose.msra.mxu0 0.0
        %1686 = vmatprep.subr.mxu0 0.0
        %1687 = vmatpush1.xpose.msra.mxu0 0.0
        %1688 = vmatprep.subr.mxu0 0.0
        %1689 = vmatpush1.xpose.msra.mxu0 0.0
        %1690 = vmatprep.subr.mxu0 0.0
        %1691 = vmatpush1.xpose.msra.mxu0 0.0
        %1692 = vmatprep.subr.mxu0 0.0
        %1693 = vmatpush1.xpose.msra.mxu0 0.0
        %1694 = vmatprep.subr.mxu0 0.0
        %1695 = vmatpush1.xpose.msra.mxu0 0.0
        %1696 = vmatprep.subr.mxu0 0.0
        %1697 = vmatpush1.xpose.msra.mxu0 0.0
        %1698 = vmatprep.subr.mxu0 0.0
        %1699 = vmatpush1.xpose.msra.mxu0 0.0
        %1700 = vmatprep.subr.mxu0 0.0
        %1701 = vmatpush1.xpose.msra.mxu0 0.0
        %1702 = vmatprep.subr.mxu0 0.0
        %1703 = vmatpush1.xpose.msra.mxu0 0.0
        %1704 = vmatprep.subr.mxu0 0.0
        %1705 = vmatpush1.xpose.msra.mxu0 0.0
        %1706 = vmatprep.subr.mxu0 0.0
        %1707 = vmatpush1.xpose.msra.mxu0 0.0
        %1708 = vmatprep.subr.mxu0 0.0
        %1709 = vmatpush1.xpose.msra.mxu0 0.0
        %1710 = vmatprep.subr.mxu0 0.0
        %1711 = vmatpush1.xpose.msra.mxu0 0.0
        %1712 = vmatprep.mubr.f32.mxu0 0.0
        %1713 = vmatmul.mubr.f32.gmra.mrb[0].mxu0 %v1637
        %v1714 = vpop.f32.mrb[0].mxu0
        %v1715 = vadd.f32 0.0, %v1714
        %v1716 = vpop.f32.mrb[0].mxu0
        %1717 = vmatprep.mubr.f32.mxu0 0.0
        %1718 = vmatmul.mubr.f32.gmra.mrb[0].mxu0 %v1640
        %v1719 = vpop.f32.mrb[0].mxu0
        %v1720 = vadd.f32 0.0, %v1719
        %v1721 = vpop.f32.mrb[0].mxu0
        %1722 = vdwg.mxu0
        %vm1723 = vcmask 130048
        %v1724 = vsel %vm1723, %v1454, -inf
        %1725 = vmax.xlane.f32.xlu0 %v1724
        %v1726 = vpop.xlane.xlu0 %1725
        %v1727 = vsel %vm1723, %v1459, -inf
        %1728 = vmax.xlane.f32.xlu0 %v1727
        %v1729 = vpop.xlane.xlu0 %1728
        %v1730 = vsel %vm1723, %v1541, -inf
        %1731 = vmax.xlane.f32.xlu0 %v1730
        %v1732 = vpop.xlane.xlu0 %1731
        %v1733 = vsel %vm1723, %v1546, -inf
        %1734 = vmax.xlane.f32.xlu0 %v1733
        %v1735 = vpop.xlane.xlu0 %1734
        %v1736 = vsel %vm1723, %v1628, -inf
        %1737 = vmax.xlane.f32.xlu0 %v1736
        %v1738 = vpop.xlane.xlu0 %1737
        %v1739 = vsel %vm1723, %v1633, -inf
        %1740 = vmax.xlane.f32.xlu0 %v1739
        %v1741 = vpop.xlane.xlu0 %1740
        %v1742 = vsel %vm1723, %v1715, -inf
        %1743 = vmax.xlane.f32.xlu0 %v1742
        %v1744 = vpop.xlane.xlu0 %1743
        %v1745 = vsel %vm1723, %v1720, -inf
        %1746 = vmax.xlane.f32.xlu0 %v1745
        %v1747 = vpop.xlane.xlu0 %1746
        %v1748 = vsub.f32 %v1454, %v1726
        %v1749 = vsub.f32 %v1459, %v1729
        %v1750 = vsub.f32 %v1541, %v1732
        %v1751 = vsub.f32 %v1546, %v1735
        %v1752 = vsub.f32 %v1628, %v1738
        %v1753 = vsub.f32 %v1633, %v1741
        %v1754 = vsub.f32 %v1715, %v1744
        %v1755 = vsub.f32 %v1720, %v1747
        %v1756 = vmul.f32 %v1748, 1.442695
        %v1757 = vpow.pop %v1756
        %v1758 = vmul.f32 %v1749, 1.442695
        %v1759 = vpow.pop %v1758
        %v1760 = vmul.f32 %v1750, 1.442695
        %v1761 = vpow.pop %v1760
        %v1762 = vmul.f32 %v1751, 1.442695
        %v1763 = vpow.pop %v1762
        %v1764 = vmul.f32 %v1752, 1.442695
        %v1765 = vpow.pop %v1764
        %v1766 = vmul.f32 %v1753, 1.442695
        %v1767 = vpow.pop %v1766
        %v1768 = vmul.f32 %v1754, 1.442695
        %v1769 = vpow.pop %v1768
        %v1770 = vmul.f32 %v1755, 1.442695
        %v1771 = vpow.pop %v1770
        %v1772 = vsel %vm1723, %v1757, 0.0
        %1773 = vadd.xlane.f32.xlu0 %v1772
        %v1774 = vpop.xlane.xlu0 %1773
        %v1775 = vsel %vm1723, %v1759, 0.0
        %1776 = vadd.xlane.f32.xlu0 %v1775
        %v1777 = vpop.xlane.xlu0 %1776
        %v1778 = vsel %vm1723, %v1761, 0.0
        %1779 = vadd.xlane.f32.xlu0 %v1778
        %v1780 = vpop.xlane.xlu0 %1779
        %v1781 = vsel %vm1723, %v1763, 0.0
        %1782 = vadd.xlane.f32.xlu0 %v1781
        %v1783 = vpop.xlane.xlu0 %1782
        %v1784 = vsel %vm1723, %v1765, 0.0
        %1785 = vadd.xlane.f32.xlu0 %v1784
        %v1786 = vpop.xlane.xlu0 %1785
        %v1787 = vsel %vm1723, %v1767, 0.0
        %1788 = vadd.xlane.f32.xlu0 %v1787
        %v1789 = vpop.xlane.xlu0 %1788
        %v1790 = vsel %vm1723, %v1769, 0.0
        %1791 = vadd.xlane.f32.xlu0 %v1790
        %v1792 = vpop.xlane.xlu0 %1791
        %v1793 = vsel %vm1723, %v1771, 0.0
        %1794 = vadd.xlane.f32.xlu0 %v1793
        %v1795 = vpop.xlane.xlu0 %1794
        %v1796 = vrcp.pop %v1774
        %v1797 = vrcp.pop %v1777
        %v1798 = vrcp.pop %v1780
        %v1799 = vrcp.pop %v1783
        %v1800 = vrcp.pop %v1786
        %v1801 = vrcp.pop %v1789
        %v1802 = vrcp.pop %v1792
        %v1803 = vrcp.pop %v1795
        %v1804 = vmul.f32 %v1757, %v1796
        %v1805 = vmul.f32 %v1759, %v1797
        %v1806 = vmul.f32 %v1761, %v1798
        %v1807 = vmul.f32 %v1763, %v1799
        %v1808 = vmul.f32 %v1765, %v1800
        %v1809 = vmul.f32 %v1767, %v1801
        %v1810 = vmul.f32 %v1769, %v1802
        %v1811 = vmul.f32 %v1771, %v1803
        %v1813 = vsel %vm1723, %v1804, 0
        %v1816 = vsel %vm1723, %v1805, 0
        %1818 = vmatprep.subr.mxu0 0.0
        %1819 = vmatpush1.msra.mxu0 %v1302
        %1820 = vmatprep.subr.mxu0 0.0
        %1821 = vmatpush1.msra.mxu0 %v1370
        %1822 = vmatprep.subr.mxu0 0.0
        %1823 = vmatpush1.msra.mxu0 0.0
        %1824 = vmatprep.subr.mxu0 0.0
        %1825 = vmatpush1.msra.mxu0 0.0
        %1826 = vmatprep.subr.mxu0 0.0
        %1827 = vmatpush1.msra.mxu0 0.0
        %1828 = vmatprep.subr.mxu0 0.0
        %1829 = vmatpush1.msra.mxu0 0.0
        %1830 = vmatprep.subr.mxu0 0.0
        %1831 = vmatpush1.msra.mxu0 0.0
        %1832 = vmatprep.subr.mxu0 0.0
        %1833 = vmatpush1.msra.mxu0 0.0
        %1834 = vmatprep.subr.mxu0 0.0
        %1835 = vmatpush1.msra.mxu0 0.0
        %1836 = vmatprep.subr.mxu0 0.0
        %1837 = vmatpush1.msra.mxu0 0.0
        %1838 = vmatprep.subr.mxu0 0.0
        %1839 = vmatpush1.msra.mxu0 0.0
        %1840 = vmatprep.subr.mxu0 0.0
        %1841 = vmatpush1.msra.mxu0 0.0
        %1842 = vmatprep.subr.mxu0 0.0
        %1843 = vmatpush1.msra.mxu0 0.0
        %1844 = vmatprep.subr.mxu0 0.0
        %1845 = vmatpush1.msra.mxu0 0.0
        %1846 = vmatprep.subr.mxu0 0.0
        %1847 = vmatpush1.msra.mxu0 0.0
        %1848 = vmatprep.subr.mxu0 0.0
        %1849 = vmatpush1.msra.mxu0 0.0
        %1850 = vmatprep.subr.mxu0 0.0
        %1851 = vmatpush1.msra.mxu0 0.0
        %1852 = vmatprep.subr.mxu0 0.0
        %1853 = vmatpush1.msra.mxu0 0.0
        %1854 = vmatprep.subr.mxu0 0.0
        %1855 = vmatpush1.msra.mxu0 0.0
        %1856 = vmatprep.subr.mxu0 0.0
        %1857 = vmatpush1.msra.mxu0 0.0
        %1858 = vmatprep.subr.mxu0 0.0
        %1859 = vmatpush1.msra.mxu0 0.0
        %1860 = vmatprep.subr.mxu0 0.0
        %1861 = vmatpush1.msra.mxu0 0.0
        %1862 = vmatprep.subr.mxu0 0.0
        %1863 = vmatpush1.msra.mxu0 0.0
        %1864 = vmatprep.subr.mxu0 0.0
        %1865 = vmatpush1.msra.mxu0 0.0
        %1866 = vmatprep.subr.mxu0 0.0
        %1867 = vmatpush1.msra.mxu0 0.0
        %1868 = vmatprep.subr.mxu0 0.0
        %1869 = vmatpush1.msra.mxu0 0.0
        %1870 = vmatprep.subr.mxu0 0.0
        %1871 = vmatpush1.msra.mxu0 0.0
        %1872 = vmatprep.subr.mxu0 0.0
        %1873 = vmatpush1.msra.mxu0 0.0
        %1874 = vmatprep.subr.mxu0 0.0
        %1875 = vmatpush1.msra.mxu0 0.0
        %1876 = vmatprep.subr.mxu0 0.0
        %1877 = vmatpush1.msra.mxu0 0.0
        %1878 = vmatprep.subr.mxu0 0.0
        %1879 = vmatpush1.msra.mxu0 0.0
        %1880 = vmatprep.subr.mxu0 0.0
        %1881 = vmatpush1.msra.mxu0 0.0
        %1882 = vmatprep.mubr.f32.mxu0 0.0
        %1883 = vmatmul.mubr.f32.gmra.mrb[0].mxu0 %v1813
        %v1884 = vpop.f32.mrb[0].mxu0
        %v1885 = vadd.f32 0.0, %v1884
        %v1886 = vpop.f32.mrb[0].mxu0
        %1887 = vmatprep.mubr.f32.mxu0 0.0
        %1888 = vmatmul.mubr.f32.gmra.mrb[0].mxu0 %v1816
        %v1889 = vpop.f32.mrb[0].mxu0
        %v1890 = vadd.f32 0.0, %v1889
        %v1891 = vpop.f32.mrb[0].mxu0
        %1892 = vdwg.mxu0
        %v1894 = vsel %vm1723, %v1806, 0
        %v1897 = vsel %vm1723, %v1807, 0
        %1899 = vmatprep.subr.mxu0 0.0
        %1900 = vmatpush1.msra.mxu0 %v1303
        %1901 = vmatprep.subr.mxu0 0.0
        %1902 = vmatpush1.msra.mxu0 %v1371
        %1903 = vmatprep.subr.mxu0 0.0
        %1904 = vmatpush1.msra.mxu0 0.0
        %1905 = vmatprep.subr.mxu0 0.0
        %1906 = vmatpush1.msra.mxu0 0.0
        %1907 = vmatprep.subr.mxu0 0.0
        %1908 = vmatpush1.msra.mxu0 0.0
        %1909 = vmatprep.subr.mxu0 0.0
        %1910 = vmatpush1.msra.mxu0 0.0
        %1911 = vmatprep.subr.mxu0 0.0
        %1912 = vmatpush1.msra.mxu0 0.0
        %1913 = vmatprep.subr.mxu0 0.0
        %1914 = vmatpush1.msra.mxu0 0.0
        %1915 = vmatprep.subr.mxu0 0.0
        %1916 = vmatpush1.msra.mxu0 0.0
        %1917 = vmatprep.subr.mxu0 0.0
        %1918 = vmatpush1.msra.mxu0 0.0
        %1919 = vmatprep.subr.mxu0 0.0
        %1920 = vmatpush1.msra.mxu0 0.0
        %1921 = vmatprep.subr.mxu0 0.0
        %1922 = vmatpush1.msra.mxu0 0.0
        %1923 = vmatprep.subr.mxu0 0.0
        %1924 = vmatpush1.msra.mxu0 0.0
        %1925 = vmatprep.subr.mxu0 0.0
        %1926 = vmatpush1.msra.mxu0 0.0
        %1927 = vmatprep.subr.mxu0 0.0
        %1928 = vmatpush1.msra.mxu0 0.0
        %1929 = vmatprep.subr.mxu0 0.0
        %1930 = vmatpush1.msra.mxu0 0.0
        %1931 = vmatprep.subr.mxu0 0.0
        %1932 = vmatpush1.msra.mxu0 0.0
        %1933 = vmatprep.subr.mxu0 0.0
        %1934 = vmatpush1.msra.mxu0 0.0
        %1935 = vmatprep.subr.mxu0 0.0
        %1936 = vmatpush1.msra.mxu0 0.0
        %1937 = vmatprep.subr.mxu0 0.0
        %1938 = vmatpush1.msra.mxu0 0.0
        %1939 = vmatprep.subr.mxu0 0.0
        %1940 = vmatpush1.msra.mxu0 0.0
        %1941 = vmatprep.subr.mxu0 0.0
        %1942 = vmatpush1.msra.mxu0 0.0
        %1943 = vmatprep.subr.mxu0 0.0
        %1944 = vmatpush1.msra.mxu0 0.0
        %1945 = vmatprep.subr.mxu0 0.0
        %1946 = vmatpush1.msra.mxu0 0.0
        %1947 = vmatprep.subr.mxu0 0.0
        %1948 = vmatpush1.msra.mxu0 0.0
        %1949 = vmatprep.subr.mxu0 0.0
        %1950 = vmatpush1.msra.mxu0 0.0
        %1951 = vmatprep.subr.mxu0 0.0
        %1952 = vmatpush1.msra.mxu0 0.0
        %1953 = vmatprep.subr.mxu0 0.0
        %1954 = vmatpush1.msra.mxu0 0.0
        %1955 = vmatprep.subr.mxu0 0.0
        %1956 = vmatpush1.msra.mxu0 0.0
        %1957 = vmatprep.subr.mxu0 0.0
        %1958 = vmatpush1.msra.mxu0 0.0
        %1959 = vmatprep.subr.mxu0 0.0
        %1960 = vmatpush1.msra.mxu0 0.0
        %1961 = vmatprep.subr.mxu0 0.0
        %1962 = vmatpush1.msra.mxu0 0.0
        %1963 = vmatprep.mubr.f32.mxu0 0.0
        %1964 = vmatmul.mubr.f32.gmra.mrb[0].mxu0 %v1894
        %v1965 = vpop.f32.mrb[0].mxu0
        %v1966 = vadd.f32 0.0, %v1965
        %v1967 = vpop.f32.mrb[0].mxu0
        %1968 = vmatprep.mubr.f32.mxu0 0.0
        %1969 = vmatmul.mubr.f32.gmra.mrb[0].mxu0 %v1897
        %v1970 = vpop.f32.mrb[0].mxu0
        %v1971 = vadd.f32 0.0, %v1970
        %v1972 = vpop.f32.mrb[0].mxu0
        %1973 = vdwg.mxu0
        %v1975 = vsel %vm1723, %v1808, 0
        %v1978 = vsel %vm1723, %v1809, 0
        %1980 = vmatprep.subr.mxu0 0.0
        %1981 = vmatpush1.msra.mxu0 %v1304
        %1982 = vmatprep.subr.mxu0 0.0
        %1983 = vmatpush1.msra.mxu0 %v1372
        %1984 = vmatprep.subr.mxu0 0.0
        %1985 = vmatpush1.msra.mxu0 0.0
        %1986 = vmatprep.subr.mxu0 0.0
        %1987 = vmatpush1.msra.mxu0 0.0
        %1988 = vmatprep.subr.mxu0 0.0
        %1989 = vmatpush1.msra.mxu0 0.0
        %1990 = vmatprep.subr.mxu0 0.0
        %1991 = vmatpush1.msra.mxu0 0.0
        %1992 = vmatprep.subr.mxu0 0.0
        %1993 = vmatpush1.msra.mxu0 0.0
        %1994 = vmatprep.subr.mxu0 0.0
        %1995 = vmatpush1.msra.mxu0 0.0
        %1996 = vmatprep.subr.mxu0 0.0
        %1997 = vmatpush1.msra.mxu0 0.0
        %1998 = vmatprep.subr.mxu0 0.0
        %1999 = vmatpush1.msra.mxu0 0.0
        %2000 = vmatprep.subr.mxu0 0.0
        %2001 = vmatpush1.msra.mxu0 0.0
        %2002 = vmatprep.subr.mxu0 0.0
        %2003 = vmatpush1.msra.mxu0 0.0
        %2004 = vmatprep.subr.mxu0 0.0
        %2005 = vmatpush1.msra.mxu0 0.0
        %2006 = vmatprep.subr.mxu0 0.0
        %2007 = vmatpush1.msra.mxu0 0.0
        %2008 = vmatprep.subr.mxu0 0.0
        %2009 = vmatpush1.msra.mxu0 0.0
        %2010 = vmatprep.subr.mxu0 0.0
        %2011 = vmatpush1.msra.mxu0 0.0
        %2012 = vmatprep.subr.mxu0 0.0
        %2013 = vmatpush1.msra.mxu0 0.0
        %2014 = vmatprep.subr.mxu0 0.0
        %2015 = vmatpush1.msra.mxu0 0.0
        %2016 = vmatprep.subr.mxu0 0.0
        %2017 = vmatpush1.msra.mxu0 0.0
        %2018 = vmatprep.subr.mxu0 0.0
        %2019 = vmatpush1.msra.mxu0 0.0
        %2020 = vmatprep.subr.mxu0 0.0
        %2021 = vmatpush1.msra.mxu0 0.0
        %2022 = vmatprep.subr.mxu0 0.0
        %2023 = vmatpush1.msra.mxu0 0.0
        %2024 = vmatprep.subr.mxu0 0.0
        %2025 = vmatpush1.msra.mxu0 0.0
        %2026 = vmatprep.subr.mxu0 0.0
        %2027 = vmatpush1.msra.mxu0 0.0
        %2028 = vmatprep.subr.mxu0 0.0
        %2029 = vmatpush1.msra.mxu0 0.0
        %2030 = vmatprep.subr.mxu0 0.0
        %2031 = vmatpush1.msra.mxu0 0.0
        %2032 = vmatprep.subr.mxu0 0.0
        %2033 = vmatpush1.msra.mxu0 0.0
        %2034 = vmatprep.subr.mxu0 0.0
        %2035 = vmatpush1.msra.mxu0 0.0
        %2036 = vmatprep.subr.mxu0 0.0
        %2037 = vmatpush1.msra.mxu0 0.0
        %2038 = vmatprep.subr.mxu0 0.0
        %2039 = vmatpush1.msra.mxu0 0.0
        %2040 = vmatprep.subr.mxu0 0.0
        %2041 = vmatpush1.msra.mxu0 0.0
        %2042 = vmatprep.subr.mxu0 0.0
        %2043 = vmatpush1.msra.mxu0 0.0
        %2044 = vmatprep.mubr.f32.mxu0 0.0
        %2045 = vmatmul.mubr.f32.gmra.mrb[0].mxu0 %v1975
        %v2046 = vpop.f32.mrb[0].mxu0
        %v2047 = vadd.f32 0.0, %v2046
        %v2048 = vpop.f32.mrb[0].mxu0
        %2049 = vmatprep.mubr.f32.mxu0 0.0
        %2050 = vmatmul.mubr.f32.gmra.mrb[0].mxu0 %v1978
        %v2051 = vpop.f32.mrb[0].mxu0
        %v2052 = vadd.f32 0.0, %v2051
        %v2053 = vpop.f32.mrb[0].mxu0
        %2054 = vdwg.mxu0
        %v2056 = vsel %vm1723, %v1810, 0
        %v2059 = vsel %vm1723, %v1811, 0
        %2061 = vmatprep.subr.mxu0 0.0
        %2062 = vmatpush1.msra.mxu0 %v1305
        %2063 = vmatprep.subr.mxu0 0.0
        %2064 = vmatpush1.msra.mxu0 %v1373
        %2065 = vmatprep.subr.mxu0 0.0
        %2066 = vmatpush1.msra.mxu0 0.0
        %2067 = vmatprep.subr.mxu0 0.0
        %2068 = vmatpush1.msra.mxu0 0.0
        %2069 = vmatprep.subr.mxu0 0.0
        %2070 = vmatpush1.msra.mxu0 0.0
        %2071 = vmatprep.subr.mxu0 0.0
        %2072 = vmatpush1.msra.mxu0 0.0
        %2073 = vmatprep.subr.mxu0 0.0
        %2074 = vmatpush1.msra.mxu0 0.0
        %2075 = vmatprep.subr.mxu0 0.0
        %2076 = vmatpush1.msra.mxu0 0.0
        %2077 = vmatprep.subr.mxu0 0.0
        %2078 = vmatpush1.msra.mxu0 0.0
        %2079 = vmatprep.subr.mxu0 0.0
        %2080 = vmatpush1.msra.mxu0 0.0
        %2081 = vmatprep.subr.mxu0 0.0
        %2082 = vmatpush1.msra.mxu0 0.0
        %2083 = vmatprep.subr.mxu0 0.0
        %2084 = vmatpush1.msra.mxu0 0.0
        %2085 = vmatprep.subr.mxu0 0.0
        %2086 = vmatpush1.msra.mxu0 0.0
        %2087 = vmatprep.subr.mxu0 0.0
        %2088 = vmatpush1.msra.mxu0 0.0
        %2089 = vmatprep.subr.mxu0 0.0
        %2090 = vmatpush1.msra.mxu0 0.0
        %2091 = vmatprep.subr.mxu0 0.0
        %2092 = vmatpush1.msra.mxu0 0.0
        %2093 = vmatprep.subr.mxu0 0.0
        %2094 = vmatpush1.msra.mxu0 0.0
        %2095 = vmatprep.subr.mxu0 0.0
        %2096 = vmatpush1.msra.mxu0 0.0
        %2097 = vmatprep.subr.mxu0 0.0
        %2098 = vmatpush1.msra.mxu0 0.0
        %2099 = vmatprep.subr.mxu0 0.0
        %2100 = vmatpush1.msra.mxu0 0.0
        %2101 = vmatprep.subr.mxu0 0.0
        %2102 = vmatpush1.msra.mxu0 0.0
        %2103 = vmatprep.subr.mxu0 0.0
        %2104 = vmatpush1.msra.mxu0 0.0
        %2105 = vmatprep.subr.mxu0 0.0
        %2106 = vmatpush1.msra.mxu0 0.0
        %2107 = vmatprep.subr.mxu0 0.0
        %2108 = vmatpush1.msra.mxu0 0.0
        %2109 = vmatprep.subr.mxu0 0.0
        %2110 = vmatpush1.msra.mxu0 0.0
        %2111 = vmatprep.subr.mxu0 0.0
        %2112 = vmatpush1.msra.mxu0 0.0
        %2113 = vmatprep.subr.mxu0 0.0
        %2114 = vmatpush1.msra.mxu0 0.0
        %2115 = vmatprep.subr.mxu0 0.0
        %2116 = vmatpush1.msra.mxu0 0.0
        %2117 = vmatprep.subr.mxu0 0.0
        %2118 = vmatpush1.msra.mxu0 0.0
        %2119 = vmatprep.subr.mxu0 0.0
        %2120 = vmatpush1.msra.mxu0 0.0
        %2121 = vmatprep.subr.mxu0 0.0
        %2122 = vmatpush1.msra.mxu0 0.0
        %2123 = vmatprep.subr.mxu0 0.0
        %2124 = vmatpush1.msra.mxu0 0.0
        %2125 = vmatprep.mubr.f32.mxu0 0.0
        %2126 = vmatmul.mubr.f32.gmra.mrb[0].mxu0 %v2056
        %v2127 = vpop.f32.mrb[0].mxu0
        %v2128 = vadd.f32 0.0, %v2127
        %v2129 = vpop.f32.mrb[0].mxu0
        %2130 = vmatprep.mubr.f32.mxu0 0.0
        %2131 = vmatmul.mubr.f32.gmra.mrb[0].mxu0 %v2059
        %v2132 = vpop.f32.mrb[0].mxu0
        %v2133 = vadd.f32 0.0, %v2132
        %v2134 = vpop.f32.mrb[0].mxu0
        %2135 = vdwg.mxu0
        %v2136 = vcombine.low %v1885, %v2047
        %v2137 = vcombine.high %v1885, %v2047
        %v2139 = vunpack.c.l.s4 1983009808
        %v2140 = vunpack.c.0.s8 %v2139
        %v2141 = vlaneseq
        %v2142 = vshrl.u32 %v2141, 7
        %v2143 = vsub.s32 %v2140, %v2142
        %v2144 = vrot.slane %v2136, %v2143
        %v2146 = vunpack.c.l.s4 1983009808
        %v2147 = vunpack.c.0.s8 %v2146
        %v2148 = vlaneseq
        %v2149 = vshrl.u32 %v2148, 7
        %v2150 = vsub.s32 %v2147, %v2149
        %v2151 = vrot.slane %v2137, %v2150
        %v2152 = vcombine.low %v1966, %v2128
        %v2153 = vcombine.high %v1966, %v2128
        %v2155 = vunpack.c.l.s4 1983009808
        %v2156 = vunpack.c.0.s8 %v2155
        %v2157 = vlaneseq
        %v2158 = vshrl.u32 %v2157, 7
        %v2159 = vsub.s32 %v2156, %v2158
        %v2160 = vrot.slane %v2152, %v2159
        %v2162 = vunpack.c.l.s4 1983009808
        %v2163 = vunpack.c.0.s8 %v2162
        %v2164 = vlaneseq
        %v2165 = vshrl.u32 %v2164, 7
        %v2166 = vsub.s32 %v2163, %v2165
        %v2167 = vrot.slane %v2153, %v2166
        %v2168 = vcombine.low %v2144, %v2160
        %v2169 = vcombine.high %v2144, %v2160
        %v2171 = vunpack.c.l.s4 1934713408
        %v2172 = vunpack.c.0.s8 %v2171
        %v2173 = vlaneseq
        %v2174 = vshrl.u32 %v2173, 7
        %v2175 = vsub.s32 %v2172, %v2174
        %v2176 = vrot.slane %v2168, %v2175
        %v2178 = vunpack.c.l.s4 1934713408
        %v2179 = vunpack.c.0.s8 %v2178
        %v2180 = vlaneseq
        %v2181 = vshrl.u32 %v2180, 7
        %v2182 = vsub.s32 %v2179, %v2181
        %v2183 = vrot.slane %v2169, %v2182
        %v2184 = vcombine.low %v2151, %v2167
        %v2185 = vcombine.high %v2151, %v2167
        %v2187 = vunpack.c.l.s4 1934713408
        %v2188 = vunpack.c.0.s8 %v2187
        %v2189 = vlaneseq
        %v2190 = vshrl.u32 %v2189, 7
        %v2191 = vsub.s32 %v2188, %v2190
        %v2192 = vrot.slane %v2184, %v2191
        %v2194 = vunpack.c.l.s4 1934713408
        %v2195 = vunpack.c.0.s8 %v2194
        %v2196 = vlaneseq
        %v2197 = vshrl.u32 %v2196, 7
        %v2198 = vsub.s32 %v2195, %v2197
        %v2199 = vrot.slane %v2185, %v2198
        %v2200 = vcombine.high %v2176, 0.0
        %v2201 = vcombine.high %v2183, 0.0
        %v2202 = vcombine.high %v2192, 0.0
        %v2203 = vcombine.high %v2199, 0.0
        %v2204 = vcombine.low %v1890, %v2052
        %v2205 = vcombine.high %v1890, %v2052
        %v2207 = vunpack.c.l.s4 1983009808
        %v2208 = vunpack.c.0.s8 %v2207
        %v2209 = vlaneseq
        %v2210 = vshrl.u32 %v2209, 7
        %v2211 = vsub.s32 %v2208, %v2210
        %v2212 = vrot.slane %v2204, %v2211
        %v2214 = vunpack.c.l.s4 1983009808
        %v2215 = vunpack.c.0.s8 %v2214
        %v2216 = vlaneseq
        %v2217 = vshrl.u32 %v2216, 7
        %v2218 = vsub.s32 %v2215, %v2217
        %v2219 = vrot.slane %v2205, %v2218
        %v2220 = vcombine.low %v1971, %v2133
        %v2221 = vcombine.high %v1971, %v2133
        %v2223 = vunpack.c.l.s4 1983009808
        %v2224 = vunpack.c.0.s8 %v2223
        %v2225 = vlaneseq
        %v2226 = vshrl.u32 %v2225, 7
        %v2227 = vsub.s32 %v2224, %v2226
        %v2228 = vrot.slane %v2220, %v2227
        %v2230 = vunpack.c.l.s4 1983009808
        %v2231 = vunpack.c.0.s8 %v2230
        %v2232 = vlaneseq
        %v2233 = vshrl.u32 %v2232, 7
        %v2234 = vsub.s32 %v2231, %v2233
        %v2235 = vrot.slane %v2221, %v2234
        %v2236 = vcombine.low %v2212, %v2228
        %v2237 = vcombine.high %v2212, %v2228
        %v2239 = vunpack.c.l.s4 1934713408
        %v2240 = vunpack.c.0.s8 %v2239
        %v2241 = vlaneseq
        %v2242 = vshrl.u32 %v2241, 7
        %v2243 = vsub.s32 %v2240, %v2242
        %v2244 = vrot.slane %v2236, %v2243
        %v2246 = vunpack.c.l.s4 1934713408
        %v2247 = vunpack.c.0.s8 %v2246
        %v2248 = vlaneseq
        %v2249 = vshrl.u32 %v2248, 7
        %v2250 = vsub.s32 %v2247, %v2249
        %v2251 = vrot.slane %v2237, %v2250
        %v2252 = vcombine.low %v2219, %v2235
        %v2253 = vcombine.high %v2219, %v2235
        %v2255 = vunpack.c.l.s4 1934713408
        %v2256 = vunpack.c.0.s8 %v2255
        %v2257 = vlaneseq
        %v2258 = vshrl.u32 %v2257, 7
        %v2259 = vsub.s32 %v2256, %v2258
        %v2260 = vrot.slane %v2252, %v2259
        %v2262 = vunpack.c.l.s4 1934713408
        %v2263 = vunpack.c.0.s8 %v2262
        %v2264 = vlaneseq
        %v2265 = vshrl.u32 %v2264, 7
        %v2266 = vsub.s32 %v2263, %v2265
        %v2267 = vrot.slane %v2253, %v2266
        %v2268 = vcombine.high %v2244, 0.0
        %v2269 = vcombine.high %v2251, 0.0
        %v2270 = vcombine.high %v2260, 0.0
        %v2271 = vcombine.high %v2267, 0.0
        %v2272 = vcombine.low %v2176, %v2183
        %v2274 = vunpack.c.l.s4 1983009808
        %v2275 = vunpack.c.0.s8 %v2274
        %v2276 = vlaneseq
        %v2277 = vshrl.u32 %v2276, 7
        %v2278 = vsub.s32 %v2275, %v2277
        %v2279 = vrot.slane %v2272, %v2278
        %v2280 = vcombine.low %v2200, %v2201
        %v2282 = vunpack.c.l.s4 1983009808
        %v2283 = vunpack.c.0.s8 %v2282
        %v2284 = vlaneseq
        %v2285 = vshrl.u32 %v2284, 7
        %v2286 = vsub.s32 %v2283, %v2285
        %v2287 = vrot.slane %v2280, %v2286
        %v2288 = vcombine.low %v2192, %v2199
        %v2290 = vunpack.c.l.s4 1983009808
        %v2291 = vunpack.c.0.s8 %v2290
        %v2292 = vlaneseq
        %v2293 = vshrl.u32 %v2292, 7
        %v2294 = vsub.s32 %v2291, %v2293
        %v2295 = vrot.slane %v2288, %v2294
        %v2296 = vcombine.low %v2202, %v2203
        %v2298 = vunpack.c.l.s4 1983009808
        %v2299 = vunpack.c.0.s8 %v2298
        %v2300 = vlaneseq
        %v2301 = vshrl.u32 %v2300, 7
        %v2302 = vsub.s32 %v2299, %v2301
        %v2303 = vrot.slane %v2296, %v2302
        %v2304 = vcombine.low %v2279, %v2287
        %v2305 = vcombine.high %v2279, %v2287
        %v2307 = vunpack.c.l.s4 1934713408
        %v2308 = vunpack.c.0.s8 %v2307
        %v2309 = vlaneseq
        %v2310 = vshrl.u32 %v2309, 7
        %v2311 = vsub.s32 %v2308, %v2310
        %v2312 = vrot.slane %v2304, %v2311
        %v2314 = vunpack.c.l.s4 1934713408
        %v2315 = vunpack.c.0.s8 %v2314
        %v2316 = vlaneseq
        %v2317 = vshrl.u32 %v2316, 7
        %v2318 = vsub.s32 %v2315, %v2317
        %v2319 = vrot.slane %v2305, %v2318
        %v2320 = vcombine.low %v2295, %v2303
        %v2321 = vcombine.high %v2295, %v2303
        %v2323 = vunpack.c.l.s4 1934713408
        %v2324 = vunpack.c.0.s8 %v2323
        %v2325 = vlaneseq
        %v2326 = vshrl.u32 %v2325, 7
        %v2327 = vsub.s32 %v2324, %v2326
        %v2328 = vrot.slane %v2320, %v2327
        %v2330 = vunpack.c.l.s4 1934713408
        %v2331 = vunpack.c.0.s8 %v2330
        %v2332 = vlaneseq
        %v2333 = vshrl.u32 %v2332, 7
        %v2334 = vsub.s32 %v2331, %v2333
        %v2335 = vrot.slane %v2321, %v2334
        %v2336 = vcombine.low %v2312, %v2328
        %v2337 = vcombine.high %v2312, %v2328
        %v2338 = vcombine.low %v2319, %v2335
        %v2339 = vcombine.high %v2319, %v2335
        %v2340 = vcombine.low %v2244, %v2251
        %v2342 = vunpack.c.l.s4 1983009808
        %v2343 = vunpack.c.0.s8 %v2342
        %v2344 = vlaneseq
        %v2345 = vshrl.u32 %v2344, 7
        %v2346 = vsub.s32 %v2343, %v2345
        %v2347 = vrot.slane %v2340, %v2346
        %v2348 = vcombine.low %v2268, %v2269
        %v2350 = vunpack.c.l.s4 1983009808
        %v2351 = vunpack.c.0.s8 %v2350
        %v2352 = vlaneseq
        %v2353 = vshrl.u32 %v2352, 7
        %v2354 = vsub.s32 %v2351, %v2353
        %v2355 = vrot.slane %v2348, %v2354
        %v2356 = vcombine.low %v2260, %v2267
        %v2358 = vunpack.c.l.s4 1983009808
        %v2359 = vunpack.c.0.s8 %v2358
        %v2360 = vlaneseq
        %v2361 = vshrl.u32 %v2360, 7
        %v2362 = vsub.s32 %v2359, %v2361
        %v2363 = vrot.slane %v2356, %v2362
        %v2364 = vcombine.low %v2270, %v2271
        %v2366 = vunpack.c.l.s4 1983009808
        %v2367 = vunpack.c.0.s8 %v2366
        %v2368 = vlaneseq
        %v2369 = vshrl.u32 %v2368, 7
        %v2370 = vsub.s32 %v2367, %v2369
        %v2371 = vrot.slane %v2364, %v2370
        %v2372 = vcombine.low %v2347, %v2355
        %v2373 = vcombine.high %v2347, %v2355
        %v2375 = vunpack.c.l.s4 1934713408
        %v2376 = vunpack.c.0.s8 %v2375
        %v2377 = vlaneseq
        %v2378 = vshrl.u32 %v2377, 7
        %v2379 = vsub.s32 %v2376, %v2378
        %v2380 = vrot.slane %v2372, %v2379
        %v2382 = vunpack.c.l.s4 1934713408
        %v2383 = vunpack.c.0.s8 %v2382
        %v2384 = vlaneseq
        %v2385 = vshrl.u32 %v2384, 7
        %v2386 = vsub.s32 %v2383, %v2385
        %v2387 = vrot.slane %v2373, %v2386
        %v2388 = vcombine.low %v2363, %v2371
        %v2389 = vcombine.high %v2363, %v2371
        %v2391 = vunpack.c.l.s4 1934713408
        %v2392 = vunpack.c.0.s8 %v2391
        %v2393 = vlaneseq
        %v2394 = vshrl.u32 %v2393, 7
        %v2395 = vsub.s32 %v2392, %v2394
        %v2396 = vrot.slane %v2388, %v2395
        %v2398 = vunpack.c.l.s4 1934713408
        %v2399 = vunpack.c.0.s8 %v2398
        %v2400 = vlaneseq
        %v2401 = vshrl.u32 %v2400, 7
        %v2402 = vsub.s32 %v2399, %v2401
        %v2403 = vrot.slane %v2389, %v2402
        %v2404 = vcombine.low %v2380, %v2396
        %v2405 = vcombine.high %v2380, %v2396
        %v2406 = vcombine.low %v2387, %v2403
        %v2407 = vcombine.high %v2387, %v2403
        %2410 = vrot.lane.b32.xlu0 %v2337, 32
        %v2411 = vpop.permute.xlu0 %2410
        %2412 = vrot.lane.b32.xlu0 %v2405, 32
        %v2413 = vpop.permute.xlu0 %2412
        %2418 = vrot.lane.b32.xlu0 %v2338, 64
        %v2419 = vpop.permute.xlu0 %2418
        %2420 = vrot.lane.b32.xlu0 %v2406, 64
        %v2421 = vpop.permute.xlu0 %2420
        %2426 = vrot.lane.b32.xlu0 %v2339, 96
        %v2427 = vpop.permute.xlu0 %2426
        %2428 = vrot.lane.b32.xlu0 %v2407, 96
        %v2429 = vpop.permute.xlu0 %2428
        %v2432 = vsel %vm1374, %v2336, %v2411
        %v2433 = vsel %vm1374, %v2404, %v2413
        %vm2434 = vcmask 523264
        %v2435 = vsel %vm2434, %v2432, %v2419
        %v2436 = vsel %vm2434, %v2433, %v2421
        %vm2437 = vcmask 785408
        %v2438 = vsel %vm2437, %v2435, %v2427
        %v2439 = vsel %vm2437, %v2436, %v2429
        %v2440 = vpack.c.bf16 %v2439, %v2438
        %v2441 = vld [vmem:[#allocation7] sm:$0xf]
        %v2442 = vld [vmem:[#allocation7 + $0x4] sm:$0xf]
        %v2443 = vld [vmem:[#allocation7 + $0x8] sm:$0xf]
        %v2444 = vld [vmem:[#allocation7 + $0xc] sm:$0xf]
        %v2445 = vld [vmem:[#allocation7 + $0x10] sm:$0xf]
        %v2446 = vld [vmem:[#allocation7 + $0x14] sm:$0xf]
        %v2447 = vld [vmem:[#allocation7 + $0x18] sm:$0xf]
        %v2448 = vld [vmem:[#allocation7 + $0x1c] sm:$0xf]
        %v2449 = vld [vmem:[#allocation7 + $0x20] sm:$0xf]
        %v2450 = vld [vmem:[#allocation7 + $0x24] sm:$0xf]
        %v2451 = vld [vmem:[#allocation7 + $0x28] sm:$0xf]
        %v2452 = vld [vmem:[#allocation7 + $0x2c] sm:$0xf]
        %v2453 = vld [vmem:[#allocation7 + $0x30] sm:$0xf]
        %v2454 = vld [vmem:[#allocation7 + $0x34] sm:$0xf]
        %v2455 = vld [vmem:[#allocation7 + $0x38] sm:$0xf]
        %v2456 = vld [vmem:[#allocation7 + $0x3c] sm:$0xf]
        %v2457 = vld [vmem:[%s3] sm:$0x1]
        %v2459 = vlaneseq
        %v2460 = vshrl.u32 %v2459, 7
        %v2461 = vsub.s32 0, %v2460
        %v2462 = vrot.slane %v2457, %v2461
        %v2480 = vunpack.c.l.b16 %v2441
        %v2481 = vunpack.c.l.b16 %v2442
        %v2482 = vunpack.c.l.b16 %v2443
        %v2483 = vunpack.c.l.b16 %v2444
        %v2484 = vunpack.c.l.b16 %v2445
        %v2485 = vunpack.c.l.b16 %v2446
        %v2486 = vunpack.c.l.b16 %v2447
        %v2487 = vunpack.c.l.b16 %v2448
        %v2488 = vunpack.c.l.b16 %v2449
        %v2489 = vunpack.c.l.b16 %v2450
        %v2490 = vunpack.c.l.b16 %v2451
        %v2491 = vunpack.c.l.b16 %v2452
        %v2492 = vunpack.c.l.b16 %v2453
        %v2493 = vunpack.c.l.b16 %v2454
        %v2494 = vunpack.c.l.b16 %v2455
        %v2495 = vunpack.c.l.b16 %v2456
        %v2496 = vpack.c.b16 %v2481, %v2480
        %v2497 = vpack.c.b16 %v2483, %v2482
        %v2498 = vpack.c.b16 %v2485, %v2484
        %v2499 = vpack.c.b16 %v2487, %v2486
        %v2500 = vpack.c.b16 %v2489, %v2488
        %v2501 = vpack.c.b16 %v2491, %v2490
        %v2502 = vpack.c.b16 %v2493, %v2492
        %v2503 = vpack.c.b16 %v2495, %v2494
        %2512 = vmatprep.subr.bf16.mxu0 0
        %2513 = vmatpush1.bf16.msra.mxu0 %v2496
        %2514 = vmatprep.subr.bf16.mxu0 0
        %2515 = vmatpush1.bf16.msra.mxu0 %v2497
        %2516 = vmatprep.subr.bf16.mxu0 0
        %2517 = vmatpush1.bf16.msra.mxu0 %v2498
        %2518 = vmatprep.subr.bf16.mxu0 0
        %2519 = vmatpush1.bf16.msra.mxu0 %v2499
        %2520 = vmatprep.subr.bf16.mxu0 0
        %2521 = vmatpush1.bf16.msra.mxu0 %v2500
        %2522 = vmatprep.subr.bf16.mxu0 0
        %2523 = vmatpush1.bf16.msra.mxu0 %v2501
        %2524 = vmatprep.subr.bf16.mxu0 0
        %2525 = vmatpush1.bf16.msra.mxu0 %v2502
        %2526 = vmatprep.subr.bf16.mxu0 0
        %2527 = vmatpush1.bf16.msra.mxu0 %v2503
        %2528 = vmatprep.subr.bf16.mxu0 0
        %2529 = vmatpush1.bf16.msra.mxu0 0
        %2530 = vmatprep.subr.bf16.mxu0 0
        %2531 = vmatpush1.bf16.msra.mxu0 0
        %2532 = vmatprep.subr.bf16.mxu0 0
        %2533 = vmatpush1.bf16.msra.mxu0 0
        %2534 = vmatprep.subr.bf16.mxu0 0
        %2535 = vmatpush1.bf16.msra.mxu0 0
        %2536 = vmatprep.subr.bf16.mxu0 0
        %2537 = vmatpush1.bf16.msra.mxu0 0
        %2538 = vmatprep.subr.bf16.mxu0 0
        %2539 = vmatpush1.bf16.msra.mxu0 0
        %2540 = vmatprep.subr.bf16.mxu0 0
        %2541 = vmatpush1.bf16.msra.mxu0 0
        %2542 = vmatprep.subr.bf16.mxu0 0
        %2543 = vmatpush1.bf16.msra.mxu0 0
        %2544 = vmatprep.mubr.bf16.mxu0 0
        %2545 = vmatmul.mubr.bf16.gmra.mrb[0].mxu0 %v2440
        %v2546 = vpop.f32.mrb[0].mxu0
        %v2547 = vadd.f32 %v2462, %v2546
        %v2548 = vpop.f32.mrb[0].mxu0
        %v2549 = vpop.f32.mrb[0].mxu0
        %v2550 = vadd.f32 %v2462, %v2549
        %v2551 = vpop.f32.mrb[0].mxu0
        %2552 = vdwg.mxu0
        %2553 = vst [vmem:[%s244] sm:$0xff] %v2547
        %2554 = vst [vmem:[%s244 + $0x8] sm:$0xff] %v2550
        %s2555 = sand.u32 %s119, 1
        %s2556 = scalar_lea.sflag [#allocation4], %s2555
        %s2557 = sand.u32 %s119, 1
        %s2558 = smul.addr %s2557, 16
        %s2559 = scalar_lea.vmem [#allocation8], %s2558
        // Predicated region
        $region49: #{tpu_custom_call.1} parent=35 // pred_check
          %p2560 = pneg %p129
        $region50: #{tpu_custom_call.1} parent=35 // pred_check_branch
          %2562 = sbr.rel (%p2560) target = $region52
        $region51: #{tpu_custom_call.1} parent=35 // pred_region
          %s2564 = ssub.s32 256, 256
          %2565 = vsyncadd %s2556, %s2564
          %s2566 = smul.addr %s22, 2
          %s2567 = smul.addr %s2566, 128
          %s2568 = scalar_lea.hbm %s4, %s2567
          %s2569 = sshll.u32 %s2559, 4
          %s2570 = int_to_ptr.vmem [resolvable:$true] %s2569
          %2575 = dma.vmem_to_hbm [thread:$0]  %s2570, 256, %s2568, %s2556, 128, 128, 8
        $region52: #{tpu_custom_call.1} parent=35 // pred_fallthru
          _
      $region36: #{tpu_custom_call.1} parent=5 // pred_fallthru
        _
      %p2576 = scmp.le.s32.totalorder 2, %s17
      // Predicated region
      $region53: #{tpu_custom_call.1} parent=5 // pred_check
        %p2577 = pneg %p2576
      $region54: #{tpu_custom_call.1} parent=5 // pred_check_branch
        %2579 = sbr.rel (%p2577) target = $region56
      $region55: #{tpu_custom_call.1} parent=5 // pred_region
        %s2580 = ssub.s32 %s17, 2
        // Predicated region
        $region57: #{tpu_custom_call.1} parent=55 // pred_check
          %p2581 = pneg %p135
        $region58: #{tpu_custom_call.1} parent=55 // pred_check_branch
          %2583 = sbr.rel (%p2581) target = $region60
        $region59: #{tpu_custom_call.1} parent=55 // pred_region
          %s2584 = sand.u32 %s120, 1
          %s2585 = scalar_lea.sflag [#allocation4], %s2584
          %s2586 = sand.u32 %s120, 1
          %s2587 = smul.addr %s2586, 16
          %s2588 = scalar_lea.vmem [#allocation8], %s2587
          %2589 = dma.done %s2585, 256
        $region60: #{tpu_custom_call.1} parent=55 // pred_fallthru
          _
      $region56: #{tpu_custom_call.1} parent=5 // pred_fallthru
        _
    $region6: #{tpu_custom_call.1} parent=1 // loop_footer
      %s21 = sadd.s32 1, %s17
    $region7: #{tpu_custom_call.1} parent=1 // loop_footer_branch
      %16 = sbr.rel target = $region3
    $region8: #{tpu_custom_call.1} parent=1 // loop_exit
      _
    %2590 = vsyncpa [#allocation3], 1
    %s2591 = scalar_lea.sflag [#allocation3], 1
    %2592 = vsyncpa %s2591, 1
    %2593 = vsyncpa [#allocation6], 1
    %2594 = vsyncpa [#allocation4], 1
    %s2595 = scalar_lea.sflag [#allocation4], 1
    %2596 = vsyncpa %s2595, 1

</llo_original>
